<compile_context>
chip_gen: v7x
topology: tpu7x:2x2x1
jax: 0.10.0
libtpu: 0.0.40
codegen_flags: <defaults>
</compile_context>

<pallas_src>
import functools

import numpy as np
import jax
import jax.numpy as jnp
from jax.experimental import pallas as pl
from jax.experimental.pallas import tpu as pltpu

BN_EPS = 1e-5          # PyTorch nn.BatchNorm1d default
DIM = 2                # input dimension
HID = 64               # hidden_dim
C_REAL = 144           # 12 x 12 RBF centers
CPAD = 256             # RBF feature count padded to a 128-lane boundary
OUTPAD = 128           # lane-dense padded head output width


# ----------------------------- shared math helpers ---------------------------
def _bn_relu_onepass(h, gamma, beta):
    """Training-mode BatchNorm1d (biased batch var) + ReLU.

    Single pass over h for the statistics, then the affine folded into one
    per-column (scale, shift) pair so the per-element work is mul+add only.
    """
    inv_b = 1.0 / h.shape[0]
    s1 = jnp.sum(h, axis=0, keepdims=True)            # col sum
    s2 = jnp.sum(h * h, axis=0, keepdims=True)        # col sum of squares
    mean = s1 * inv_b
    var = jnp.maximum(s2 * inv_b - mean * mean, 0.0)   # guard tiny cancellation
    scale = gamma * jax.lax.rsqrt(var + BN_EPS)        # (1, HID)
    shift = beta - mean * scale                        # (1, HID)
    return jnp.maximum(h * scale + shift, 0.0)


# ----------------------------- the fused kernel ------------------------------
def logistic_kernel(inv_2sigma2,
                    x_ref, wfused_ref, w1r_ref, w2_ref, w3_ref, slab_ref,
                    out_ref):
    x = x_ref[...]                                    # (B, DIM)

    # Unpack small params from the packed slab (static, lane-0-aligned slices).
    c2s = slab_ref[0:1, :]                            # (1, CPAD)  ||c||^2/(2s^2)
    g1  = slab_ref[1:2, 0:HID]                        # (1, HID)
    be1 = slab_ref[2:3, 0:HID]
    g2  = slab_ref[3:4, 0:HID]
    be2 = slab_ref[4:5, 0:HID]
    b3  = slab_ref[5:6, 0:1]                          # (1, 1) head bias

    # Fused K=2 matmul: x @ [centers^T/sigma^2 | W1_x]  -> one MXU pass.
    xcw = jnp.dot(x, wfused_ref[...], preferred_element_type=jnp.float32)  # (B, CPAD+HID)
    xc_scaled = xcw[:, 0:CPAD]                        # lane-aligned slice
    xw1 = xcw[:, CPAD:CPAD + HID]                     # lane-aligned slice

    # RBF featurization with the sigma scale folded into the weights.
    x2_scaled = jnp.sum(x * x, axis=-1, keepdims=True) * inv_2sigma2        # (B, 1)
    rbf = jnp.exp(xc_scaled - x2_scaled - c2s)        # (B, CPAD); padded cols killed by zero w1r rows

    # Layer 0: Linear(dim + C -> HID)  (b1 dropped: cancels in training-mode BN)
    h = xw1 + jnp.dot(rbf, w1r_ref[...], preferred_element_type=jnp.float32)
    h = _bn_relu_onepass(h, g1, be1)

    # Layer 1: Linear(HID -> HID)  (b2 dropped) + BN + ReLU
    h = jnp.dot(h, w2_ref[...], preferred_element_type=jnp.float32)
    h = _bn_relu_onepass(h, g2, be2)

    # Head: Linear(HID -> 1), zero-padded to 128 lanes for an unmasked store.
    logits = jnp.dot(h, w3_ref[...], preferred_element_type=jnp.float32) + b3
    out_ref[...] = jax.nn.sigmoid(logits)             # (B, OUTPAD); col 0 is the answer


def logistic_model_forward(x, packed, sigma):
    """x: (B, DIM) float32 -> (B, 1) float32 probabilities."""
    # NOTE: sigma must be a Python float (it is baked in at trace time).
    assert isinstance(sigma, float)
    B = x.shape[0]
    assert B % 8 == 0, "batch should be sublane-aligned (multiple of 8)"
    inv_2sigma2 = 1.0 / (2.0 * sigma * sigma)

    args = (x, packed["wfused"], packed["w1r"], packed["w2"],
            packed["w3pad"], packed["slab"])
    vmem = pl.BlockSpec(memory_space=pltpu.MemorySpace.VMEM)

    flops = (2 * B * (DIM * (CPAD + HID) + CPAD * HID + HID * HID + HID * OUTPAD)
             + 8 * B * CPAD + 16 * B * HID + 4 * B * OUTPAD)
    transcendentals = B * CPAD + B * OUTPAD + 2 * HID
    bytes_accessed = 4 * (B * DIM + DIM * (CPAD + HID) + CPAD * HID
                          + HID * HID + HID * OUTPAD + 8 * CPAD + B * OUTPAD)

    out = pl.pallas_call(
        functools.partial(logistic_kernel, inv_2sigma2),
        out_shape=jax.ShapeDtypeStruct((B, OUTPAD), jnp.float32),
        in_specs=[vmem] * len(args),
        out_specs=vmem,
        cost_estimate=pl.CostEstimate(flops=int(flops),
                                      transcendentals=int(transcendentals),
                                      bytes_accessed=int(bytes_accessed)),
    )(*args)
    return out[:, :1]


# ----------------------------- pure-JAX references ---------------------------
def reference_kernel_math(x, packed, sigma):
    """Mirrors the kernel's (mathematically equivalent) algebra in plain JAX."""
    inv = 1.0 / (2.0 * sigma * sigma)
    slab = packed["slab"]
    c2s = slab[0:1, :]
    g1, be1 = slab[1:2, :HID], slab[2:3, :HID]
    g2, be2 = slab[3:4, :HID], slab[4:5, :HID]
    b3 = slab[5, 0]
    xcw = x @ packed["wfused"]
    xc, xw1 = xcw[:, :CPAD], xcw[:, CPAD:CPAD + HID]
    x2 = jnp.sum(x * x, axis=-1, keepdims=True) * inv
    rbf = jnp.exp(xc - x2 - c2s)
    h = _bn_relu_onepass(xw1 + rbf @ packed["w1r"], g1, be1)
    h = _bn_relu_onepass(h @ packed["w2"], g2, be2)
    logits = h @ packed["w3pad"] + b3
    return jax.nn.sigmoid(logits)[:, :1]


def _bn_train_twopass(h, gamma, beta):
    mean = jnp.mean(h, axis=0, keepdims=True)
    var = jnp.mean((h - mean) ** 2, axis=0, keepdims=True)   # biased, as torch
    return gamma * (h - mean) * jax.lax.rsqrt(var + BN_EPS) + beta


def reference_pytorch(x, raw, sigma):
    """Faithful transcription of the PyTorch module's forward (training mode)."""
    diff = x[:, None, :] - raw["centers"][None, :, :]
    d2 = jnp.sum(diff * diff, axis=-1)
    rbf = jnp.exp(-d2 / (2.0 * sigma * sigma))
    feats = jnp.concatenate([x, rbf], axis=-1)
    h = feats @ raw["w1"] + raw["b1"]
    h = jnp.maximum(_bn_train_twopass(h, raw["g1"], raw["be1"]), 0.0)
    h = h @ raw["w2"] + raw["b2"]
    h = jnp.maximum(_bn_train_twopass(h, raw["g2"], raw["be2"]), 0.0)
    logits = h @ raw["w3"] + raw["b3"]
    return jax.nn.sigmoid(logits)


# ----------------------------- parameter construction ------------------------
def make_params(key, rbf_sigma=8.0, rbf_width=60.0, rbf_num=12):
    lin = np.linspace(-rbf_width, rbf_width, num=rbf_num)
    centers = np.array([[i, j] for i in lin for j in lin], dtype=np.float32)  # (144, 2)
    C = centers.shape[0]
    assert C == C_REAL and C <= CPAD
    n_features = DIM + C

    def linear_init(k, fan_in, fan_out):
        # PyTorch nn.Linear default: U(-1/sqrt(fan_in), 1/sqrt(fan_in))
        kw, kb = jax.random.split(k)
        bound = 1.0 / np.sqrt(fan_in)
        w = jax.random.uniform(kw, (fan_in, fan_out), jnp.float32, -bound, bound)
        b = jax.random.uniform(kb, (fan_out,), jnp.float32, -bound, bound)
        return w, b

    k1, k2, k3, k4 = jax.random.split(key, 4)
    w1, b1 = linear_init(k1, n_features, HID)
    w2, b2 = linear_init(k2, HID, HID)
    w3, b3 = linear_init(k3, HID, 1)
    # A fresh BatchNorm1d has gamma=1, beta=0; use mild random values to make
    # the numerical check stronger (forward semantics are identical).
    kg1, kbe1, kg2, kbe2 = jax.random.split(k4, 4)
    g1 = 1.0 + 0.1 * jax.random.normal(kg1, (HID,), jnp.float32)
    be1 = 0.1 * jax.random.normal(kbe1, (HID,), jnp.float32)
    g2 = 1.0 + 0.1 * jax.random.normal(kg2, (HID,), jnp.float32)
    be2 = 0.1 * jax.random.normal(kbe2, (HID,), jnp.float32)

    raw = dict(centers=jnp.asarray(centers), w1=w1, b1=b1, w2=w2, b2=b2,
               w3=w3, b3=b3, g1=g1, be1=be1, g2=g2, be2=be2)

    # ---- packed / kernel-optimized parameters ----
    sig2 = rbf_sigma * rbf_sigma
    centers_pad = np.zeros((CPAD, DIM), np.float32)
    centers_pad[:C] = centers
    ct_scaled = jnp.asarray(centers_pad.T / sig2)                       # (DIM, CPAD)
    c2_scaled = jnp.asarray((centers_pad ** 2).sum(-1) / (2.0 * sig2))  # (CPAD,)

    w1x = w1[:DIM]                                                      # (DIM, HID)
    w1r = jnp.zeros((CPAD, HID), jnp.float32).at[:C].set(w1[DIM:])      # zero-padded rows
    wfused = jnp.concatenate([ct_scaled, w1x], axis=1)                  # (DIM, CPAD+HID)
    w3pad = jnp.zeros((HID, OUTPAD), jnp.float32).at[:, 0].set(w3[:, 0])

    slab = jnp.zeros((8, CPAD), jnp.float32)
    slab = slab.at[0, :].set(c2_scaled)
    slab = slab.at[1, :HID].set(g1)
    slab = slab.at[2, :HID].set(be1)
    slab = slab.at[3, :HID].set(g2)
    slab = slab.at[4, :HID].set(be2)
    slab = slab.at[5, 0].set(b3[0])
    packed = dict(wfused=wfused, w1r=w1r, w2=w2, w3pad=w3pad, slab=slab)

    return raw, packed, float(rbf_sigma)


if __name__ == "__main__":
    key = jax.random.PRNGKey(0)
    kx, kp = jax.random.split(key)

    B = 128   # amortizes per-call overhead and fills MXU rows; still tiny
    x = jax.random.normal(kx, (B, DIM), jnp.float32) * 20.0  # spread over RBF grid
    raw, packed, sigma = make_params(kp)

    out = jax.block_until_ready(logistic_model_forward(x, packed, sigma))
    assert out.shape == (B, 1)

    # Tight check: same algebra as the kernel, in plain JAX.
    ref_tight = jax.block_until_ready(reference_kernel_math(x, packed, sigma))
    np.testing.assert_allclose(np.asarray(out), np.asarray(ref_tight),
                               rtol=1e-5, atol=1e-5)

    # Looser check against the faithful PyTorch-formulation reference
    # (different but mathematically equivalent arithmetic ordering).
    ref_torch = jax.block_until_ready(reference_pytorch(x, raw, sigma))
    np.testing.assert_allclose(np.asarray(out), np.asarray(ref_torch),
                               rtol=2e-3, atol=2e-4)

    print("KERNEL_OK")
</pallas_src>

<mosaic_0001>
module attributes {stable_mosaic.version = 11 : i64} {
  func.func @logistic_kernel(%arg0: memref<128x2xf32, #tpu.memory_space<vmem>>, %arg1: memref<2x320xf32, #tpu.memory_space<vmem>>, %arg2: memref<256x64xf32, #tpu.memory_space<vmem>>, %arg3: memref<64x64xf32, #tpu.memory_space<vmem>>, %arg4: memref<64x128xf32, #tpu.memory_space<vmem>>, %arg5: memref<8x256xf32, #tpu.memory_space<vmem>>, %arg6: memref<128x128xf32, #tpu.memory_space<vmem>>) attributes {dimension_semantics = [], scalar_prefetch = 0 : i64, scratch_operands = 0 : i64, tpu.core_type = #tpu.core_type<tc>} {
    %c0 = arith.constant 0 : index
    %c0_0 = arith.constant 0 : index
    %0 = vector.load %arg0[%c0, %c0_0] : memref<128x2xf32, #tpu.memory_space<vmem>>, vector<128x2xf32>
    %c0_1 = arith.constant 0 : index
    %c0_2 = arith.constant 0 : index
    %1 = vector.load %arg5[%c0_1, %c0_2] : memref<8x256xf32, #tpu.memory_space<vmem>>, vector<1x256xf32>
    %c1 = arith.constant 1 : index
    %c0_3 = arith.constant 0 : index
    %2 = vector.load %arg5[%c1, %c0_3] : memref<8x256xf32, #tpu.memory_space<vmem>>, vector<1x64xf32>
    %c2 = arith.constant 2 : index
    %c0_4 = arith.constant 0 : index
    %3 = vector.load %arg5[%c2, %c0_4] : memref<8x256xf32, #tpu.memory_space<vmem>>, vector<1x64xf32>
    %c3 = arith.constant 3 : index
    %c0_5 = arith.constant 0 : index
    %4 = vector.load %arg5[%c3, %c0_5] : memref<8x256xf32, #tpu.memory_space<vmem>>, vector<1x64xf32>
    %c4 = arith.constant 4 : index
    %c0_6 = arith.constant 0 : index
    %5 = vector.load %arg5[%c4, %c0_6] : memref<8x256xf32, #tpu.memory_space<vmem>>, vector<1x64xf32>
    %c5 = arith.constant 5 : index
    %c0_7 = arith.constant 0 : index
    %6 = vector.load %arg5[%c5, %c0_7] : memref<8x256xf32, #tpu.memory_space<vmem>>, vector<1x1xf32>
    %c0_8 = arith.constant 0 : index
    %c0_9 = arith.constant 0 : index
    %7 = vector.load %arg1[%c0_8, %c0_9] : memref<2x320xf32, #tpu.memory_space<vmem>>, vector<2x320xf32>
    %cst = arith.constant dense<0.000000e+00> : vector<128x320xf32>
    %8 = tpu.matmul %0, %7, %cst {dimension_numbers = #tpu.dot_dimension_numbers<[1], [0], [0], [1], [0, 0, 1, 1], [], []>} : vector<128x2xf32>, vector<2x320xf32>, vector<128x320xf32> -> vector<128x320xf32>
    %9 = vector.extract_strided_slice %8 {offsets = [0, 0], sizes = [128, 256], strides = [1, 1]} : vector<128x320xf32> to vector<128x256xf32>
    %10 = vector.extract_strided_slice %8 {offsets = [0, 256], sizes = [128, 64], strides = [1, 1]} : vector<128x320xf32> to vector<128x64xf32>
    %11 = arith.mulf %0, %0 : vector<128x2xf32>
    %cst_10 = arith.constant dense<0.000000e+00> : vector<128xf32>
    %12 = vector.multi_reduction <add>, %11, %cst_10 [1] : vector<128x2xf32> to vector<128xf32>
    %13 = vector.shape_cast %12 : vector<128xf32> to vector<128x1xf32>
    %cst_11 = arith.constant 7.812500e-03 : f32
    %14 = vector.broadcast %cst_11 : f32 to vector<128x1xf32>
    %15 = arith.mulf %13, %14 : vector<128x1xf32>
    %16 = vector.broadcast %15 : vector<128x1xf32> to vector<128x256xf32>
    %17 = arith.subf %9, %16 : vector<128x256xf32>
    %18 = vector.broadcast %1 : vector<1x256xf32> to vector<128x256xf32>
    %19 = arith.subf %17, %18 : vector<128x256xf32>
    %20 = math.exp %19 : vector<128x256xf32>
    %c0_12 = arith.constant 0 : index
    %c0_13 = arith.constant 0 : index
    %21 = vector.load %arg2[%c0_12, %c0_13] : memref<256x64xf32, #tpu.memory_space<vmem>>, vector<256x64xf32>
    %cst_14 = arith.constant dense<0.000000e+00> : vector<128x64xf32>
    %22 = tpu.matmul %20, %21, %cst_14 {dimension_numbers = #tpu.dot_dimension_numbers<[1], [0], [0], [1], [0, 0, 1, 1], [], []>} : vector<128x256xf32>, vector<256x64xf32>, vector<128x64xf32> -> vector<128x64xf32>
    %23 = arith.addf %10, %22 : vector<128x64xf32>
    %cst_15 = arith.constant dense<0.000000e+00> : vector<64xf32>
    %24 = vector.multi_reduction <add>, %23, %cst_15 [0] : vector<128x64xf32> to vector<64xf32>
    %25 = vector.shape_cast %24 : vector<64xf32> to vector<1x64xf32>
    %26 = arith.mulf %23, %23 : vector<128x64xf32>
    %cst_16 = arith.constant dense<0.000000e+00> : vector<64xf32>
    %27 = vector.multi_reduction <add>, %26, %cst_16 [0] : vector<128x64xf32> to vector<64xf32>
    %28 = vector.shape_cast %27 : vector<64xf32> to vector<1x64xf32>
    %cst_17 = arith.constant 7.812500e-03 : f32
    %29 = vector.broadcast %cst_17 : f32 to vector<1x64xf32>
    %30 = arith.mulf %25, %29 : vector<1x64xf32>
    %cst_18 = arith.constant 7.812500e-03 : f32
    %31 = vector.broadcast %cst_18 : f32 to vector<1x64xf32>
    %32 = arith.mulf %28, %31 : vector<1x64xf32>
    %33 = arith.mulf %30, %30 : vector<1x64xf32>
    %34 = arith.subf %32, %33 : vector<1x64xf32>
    %cst_19 = arith.constant 0.000000e+00 : f32
    %35 = vector.broadcast %cst_19 : f32 to vector<1x64xf32>
    %36 = arith.maximumf %34, %35 : vector<1x64xf32>
    %cst_20 = arith.constant 9.99999974E-6 : f32
    %37 = vector.broadcast %cst_20 : f32 to vector<1x64xf32>
    %38 = arith.addf %36, %37 : vector<1x64xf32>
    %39 = math.rsqrt %38 : vector<1x64xf32>
    %40 = arith.mulf %2, %39 : vector<1x64xf32>
    %41 = arith.mulf %30, %40 : vector<1x64xf32>
    %42 = arith.subf %3, %41 : vector<1x64xf32>
    %43 = vector.broadcast %40 : vector<1x64xf32> to vector<128x64xf32>
    %44 = arith.mulf %23, %43 : vector<128x64xf32>
    %45 = vector.broadcast %42 : vector<1x64xf32> to vector<128x64xf32>
    %46 = arith.addf %44, %45 : vector<128x64xf32>
    %cst_21 = arith.constant 0.000000e+00 : f32
    %47 = vector.broadcast %cst_21 : f32 to vector<128x64xf32>
    %48 = arith.maximumf %46, %47 : vector<128x64xf32>
    %c0_22 = arith.constant 0 : index
    %c0_23 = arith.constant 0 : index
    %49 = vector.load %arg3[%c0_22, %c0_23] : memref<64x64xf32, #tpu.memory_space<vmem>>, vector<64x64xf32>
    %cst_24 = arith.constant dense<0.000000e+00> : vector<128x64xf32>
    %50 = tpu.matmul %48, %49, %cst_24 {dimension_numbers = #tpu.dot_dimension_numbers<[1], [0], [0], [1], [0, 0, 1, 1], [], []>} : vector<128x64xf32>, vector<64x64xf32>, vector<128x64xf32> -> vector<128x64xf32>
    %cst_25 = arith.constant dense<0.000000e+00> : vector<64xf32>
    %51 = vector.multi_reduction <add>, %50, %cst_25 [0] : vector<128x64xf32> to vector<64xf32>
    %52 = vector.shape_cast %51 : vector<64xf32> to vector<1x64xf32>
    %53 = arith.mulf %50, %50 : vector<128x64xf32>
    %cst_26 = arith.constant dense<0.000000e+00> : vector<64xf32>
    %54 = vector.multi_reduction <add>, %53, %cst_26 [0] : vector<128x64xf32> to vector<64xf32>
    %55 = vector.shape_cast %54 : vector<64xf32> to vector<1x64xf32>
    %cst_27 = arith.constant 7.812500e-03 : f32
    %56 = vector.broadcast %cst_27 : f32 to vector<1x64xf32>
    %57 = arith.mulf %52, %56 : vector<1x64xf32>
    %cst_28 = arith.constant 7.812500e-03 : f32
    %58 = vector.broadcast %cst_28 : f32 to vector<1x64xf32>
    %59 = arith.mulf %55, %58 : vector<1x64xf32>
    %60 = arith.mulf %57, %57 : vector<1x64xf32>
    %61 = arith.subf %59, %60 : vector<1x64xf32>
    %cst_29 = arith.constant 0.000000e+00 : f32
    %62 = vector.broadcast %cst_29 : f32 to vector<1x64xf32>
    %63 = arith.maximumf %61, %62 : vector<1x64xf32>
    %cst_30 = arith.constant 9.99999974E-6 : f32
    %64 = vector.broadcast %cst_30 : f32 to vector<1x64xf32>
    %65 = arith.addf %63, %64 : vector<1x64xf32>
    %66 = math.rsqrt %65 : vector<1x64xf32>
    %67 = arith.mulf %4, %66 : vector<1x64xf32>
    %68 = arith.mulf %57, %67 : vector<1x64xf32>
    %69 = arith.subf %5, %68 : vector<1x64xf32>
    %70 = vector.broadcast %67 : vector<1x64xf32> to vector<128x64xf32>
    %71 = arith.mulf %50, %70 : vector<128x64xf32>
    %72 = vector.broadcast %69 : vector<1x64xf32> to vector<128x64xf32>
    %73 = arith.addf %71, %72 : vector<128x64xf32>
    %cst_31 = arith.constant 0.000000e+00 : f32
    %74 = vector.broadcast %cst_31 : f32 to vector<128x64xf32>
    %75 = arith.maximumf %73, %74 : vector<128x64xf32>
    %c0_32 = arith.constant 0 : index
    %c0_33 = arith.constant 0 : index
    %76 = vector.load %arg4[%c0_32, %c0_33] : memref<64x128xf32, #tpu.memory_space<vmem>>, vector<64x128xf32>
    %cst_34 = arith.constant dense<0.000000e+00> : vector<128x128xf32>
    %77 = tpu.matmul %75, %76, %cst_34 {dimension_numbers = #tpu.dot_dimension_numbers<[1], [0], [0], [1], [0, 0, 1, 1], [], []>} : vector<128x64xf32>, vector<64x128xf32>, vector<128x128xf32> -> vector<128x128xf32>
    %78 = vector.broadcast %6 : vector<1x1xf32> to vector<128x128xf32>
    %79 = arith.addf %77, %78 : vector<128x128xf32>
    %80 = arith.negf %79 : vector<128x128xf32>
    %81 = math.exp %80 : vector<128x128xf32>
    %cst_35 = arith.constant 1.000000e+00 : f32
    %82 = vector.broadcast %cst_35 : f32 to vector<128x128xf32>
    %83 = arith.addf %82, %81 : vector<128x128xf32>
    %84 = arith.divf %82, %83 : vector<128x128xf32>
    %c0_36 = arith.constant 0 : index
    %c0_37 = arith.constant 0 : index
    %85 = vector.load %arg6[%c0_36, %c0_37] : memref<128x128xf32, #tpu.memory_space<vmem>>, vector<128x128xf32>
    tpu.vector_store %arg6[%c0_36, %c0_37], %84 {strides = array<i32>} : memref<128x128xf32, #tpu.memory_space<vmem>>, vector<128x128xf32>,
    return
  }
}

</mosaic_0001>

<llo_original>
// kernel: tpu_custom_call.1
$region0: #{tpu_custom_call.1}
  #allocation0 [shape = 'u32[]', space=smem, size = 0x4, offset = 0x4, fixed_abs, tag = 'smem constant byte address 0x4 - core index']
  #allocation1 [shape = 'u32[144,128]{1,0:T(1,128)}', space=vmem, size = 0x12000, scoped, tag = 'internal scratch']
  %s0 = inlined_call_operand.vmem [shape: f32[128,2], index: 0, kind: input, shape index: {}]
  %s1 = inlined_call_operand.vmem [shape: f32[2,320], index: 1, kind: input, shape index: {}]
  %s2 = inlined_call_operand.vmem [shape: f32[256,64], index: 2, kind: input, shape index: {}]
  %s3 = inlined_call_operand.vmem [shape: f32[64,64], index: 3, kind: input, shape index: {}]
  %s4 = inlined_call_operand.vmem [shape: f32[64,128], index: 4, kind: input, shape index: {}]
  %s5 = inlined_call_operand.vmem [shape: f32[8,256], index: 5, kind: input, shape index: {}]
  %s6 = inlined_call_operand.hbm [shape: f32[128,128], index: 6, kind: output, shape index: {}]
  %s7 = sld [smem:[#allocation0]]
  $region34: #{tpu_custom_call.1} parent=0
    _
  %s9 = ssub.s32 1, %s7
  %s10 = scalar_select 0, %s9, %s7
  $region1: #{tpu_custom_call.1} parent=0
    #allocation2 [shape = 'u8[65536]{0}', space=vmem, size = 0x10000, scoped, tag = 'output window, operand 0, single buffered']
    #allocation3 [shape = 's32[1]{0}', space=sflag, size = 0x4, scoped, tag = 'scoped memory for tpu_custom_call.1']
    %11 = vsyncpa [#allocation3], 0
    // Predicated region
    $region2: #{tpu_custom_call.1} parent=1 // pred_check
      _
    $region3: #{tpu_custom_call.1} parent=1 // pred_check_branch
      %13 = sbr.rel (0) target = $region5
    $region4: #{tpu_custom_call.1} parent=1 // pred_region
      _
    $region5: #{tpu_custom_call.1} parent=1 // pred_fallthru
      _
    // Predicated region
    $region6: #{tpu_custom_call.1} parent=1 // pred_check
      _
    $region7: #{tpu_custom_call.1} parent=1 // pred_check_branch
      %15 = sbr.rel (0) target = $region9
    $region8: #{tpu_custom_call.1} parent=1 // pred_region
      _
    $region9: #{tpu_custom_call.1} parent=1 // pred_fallthru
      _
    // Predicated region
    $region10: #{tpu_custom_call.1} parent=1 // pred_check
      _
    $region11: #{tpu_custom_call.1} parent=1 // pred_check_branch
      %17 = sbr.rel (0) target = $region13
    $region12: #{tpu_custom_call.1} parent=1 // pred_region
      _
    $region13: #{tpu_custom_call.1} parent=1 // pred_fallthru
      _
    // Predicated region
    $region14: #{tpu_custom_call.1} parent=1 // pred_check
      _
    $region15: #{tpu_custom_call.1} parent=1 // pred_check_branch
      %19 = sbr.rel (0) target = $region17
    $region16: #{tpu_custom_call.1} parent=1 // pred_region
      _
    $region17: #{tpu_custom_call.1} parent=1 // pred_fallthru
      _
    // Predicated region
    $region18: #{tpu_custom_call.1} parent=1 // pred_check
      _
    $region19: #{tpu_custom_call.1} parent=1 // pred_check_branch
      %21 = sbr.rel (0) target = $region21
    $region20: #{tpu_custom_call.1} parent=1 // pred_region
      _
    $region21: #{tpu_custom_call.1} parent=1 // pred_fallthru
      _
    // Predicated region
    $region22: #{tpu_custom_call.1} parent=1 // pred_check
      _
    $region23: #{tpu_custom_call.1} parent=1 // pred_check_branch
      %23 = sbr.rel (0) target = $region25
    $region24: #{tpu_custom_call.1} parent=1 // pred_region
      _
    $region25: #{tpu_custom_call.1} parent=1 // pred_fallthru
      _
    %v24 = vld [vmem:[%s0] sm:$0xff]
    %v25 = vld [vmem:[%s0 + $0x8] sm:$0xff]
    %v26 = vld [vmem:[%s0 + $0x10] sm:$0xff]
    %v27 = vld [vmem:[%s0 + $0x18] sm:$0xff]
    %v28 = vld [vmem:[%s0 + $0x20] sm:$0xff]
    %v29 = vld [vmem:[%s0 + $0x28] sm:$0xff]
    %v30 = vld [vmem:[%s0 + $0x30] sm:$0xff]
    %v31 = vld [vmem:[%s0 + $0x38] sm:$0xff]
    %v32 = vld [vmem:[%s0 + $0x40] sm:$0xff]
    %v33 = vld [vmem:[%s0 + $0x48] sm:$0xff]
    %v34 = vld [vmem:[%s0 + $0x50] sm:$0xff]
    %v35 = vld [vmem:[%s0 + $0x58] sm:$0xff]
    %v36 = vld [vmem:[%s0 + $0x60] sm:$0xff]
    %v37 = vld [vmem:[%s0 + $0x68] sm:$0xff]
    %v38 = vld [vmem:[%s0 + $0x70] sm:$0xff]
    %v39 = vld [vmem:[%s0 + $0x78] sm:$0xff]
    %v40 = vld [vmem:[%s5] ss:$8 sm:$0x3]
    %v41 = vld [vmem:[%s5 + $0x1] ss:$0 sm:$0xff]
    %v42 = vld [vmem:[%s5 + $0x2] ss:$0 sm:$0xff]
    %v43 = vld [vmem:[%s5 + $0x3] ss:$0 sm:$0xff]
    %v44 = vld [vmem:[%s5 + $0x4] ss:$0 sm:$0xff]
    %v45 = vld [vmem:[%s5 + $0x5] ss:$0 sm:$0xff]
    %v46 = vld [vmem:[%s1] sm:$0x3f]
    %v48 = vcombine.high %v46, %v46
    %v50 = vunpack.c.l.s4 1983009808
    %v51 = vunpack.c.0.s8 %v50
    %v52 = vlaneseq
    %v53 = vshrl.u32 %v52, 7
    %v54 = vsub.s32 %v51, %v53
    %v55 = vrot.slane %v46, %v54
    %v57 = vunpack.c.l.s4 1983009808
    %v58 = vunpack.c.0.s8 %v57
    %v59 = vlaneseq
    %v60 = vshrl.u32 %v59, 7
    %v61 = vsub.s32 %v58, %v60
    %v62 = vrot.slane %v48, %v61
    %v63 = vcombine.high %v55, %v55
    %vm64 = vcmask 15360
    %v66 = vsel %vm64, %v24, 0
    %v69 = vsel %vm64, %v25, 0
    %v72 = vsel %vm64, %v26, 0
    %v75 = vsel %vm64, %v27, 0
    %v78 = vsel %vm64, %v28, 0
    %v81 = vsel %vm64, %v29, 0
    %v84 = vsel %vm64, %v30, 0
    %v87 = vsel %vm64, %v31, 0
    %v90 = vsel %vm64, %v32, 0
    %v93 = vsel %vm64, %v33, 0
    %v96 = vsel %vm64, %v34, 0
    %v99 = vsel %vm64, %v35, 0
    %v102 = vsel %vm64, %v36, 0
    %v105 = vsel %vm64, %v37, 0
    %v108 = vsel %vm64, %v38, 0
    %v111 = vsel %vm64, %v39, 0
    %vm113 = vcmask 1041408
    %v114 = vsel %vm113, %v55, 0
    %v116 = vsel %vm113, %v63, 0
    %v118 = vsel %vm113, %v62, 0
    %120 = vmatprep.subr.mxu0 %v116
    %121 = vmatpush1.msra.mxu0 %v114
    %122 = vmatprep.subr.mxu0 0.0
    %123 = vmatpush1.msra.mxu0 0.0
    %124 = vmatprep.subr.mxu0 0.0
    %125 = vmatpush1.msra.mxu0 0.0
    %126 = vmatprep.subr.mxu0 0.0
    %127 = vmatpush1.msra.mxu0 0.0
    %128 = vmatprep.subr.mxu0 0.0
    %129 = vmatpush1.msra.mxu0 0.0
    %130 = vmatprep.subr.mxu0 0.0
    %131 = vmatpush1.msra.mxu0 0.0
    %132 = vmatprep.subr.mxu0 0.0
    %133 = vmatpush1.msra.mxu0 0.0
    %134 = vmatprep.subr.mxu0 0.0
    %135 = vmatpush1.msra.mxu0 0.0
    %136 = vmatprep.subr.mxu0 0.0
    %137 = vmatpush1.msra.mxu0 0.0
    %138 = vmatprep.subr.mxu0 0.0
    %139 = vmatpush1.msra.mxu0 0.0
    %140 = vmatprep.subr.mxu0 0.0
    %141 = vmatpush1.msra.mxu0 0.0
    %142 = vmatprep.subr.mxu0 0.0
    %143 = vmatpush1.msra.mxu0 0.0
    %144 = vmatprep.subr.mxu0 0.0
    %145 = vmatpush1.msra.mxu0 0.0
    %146 = vmatprep.subr.mxu0 0.0
    %147 = vmatpush1.msra.mxu0 0.0
    %148 = vmatprep.subr.mxu0 0.0
    %149 = vmatpush1.msra.mxu0 0.0
    %150 = vmatprep.subr.mxu0 0.0
    %151 = vmatpush1.msra.mxu0 0.0
    %152 = vmatprep.subr.mxu0 0.0
    %153 = vmatpush1.msra.mxu0 0.0
    %154 = vmatprep.subr.mxu0 0.0
    %155 = vmatpush1.msra.mxu0 0.0
    %156 = vmatprep.subr.mxu0 0.0
    %157 = vmatpush1.msra.mxu0 0.0
    %158 = vmatprep.subr.mxu0 0.0
    %159 = vmatpush1.msra.mxu0 0.0
    %160 = vmatprep.subr.mxu0 0.0
    %161 = vmatpush1.msra.mxu0 0.0
    %162 = vmatprep.subr.mxu0 0.0
    %163 = vmatpush1.msra.mxu0 0.0
    %164 = vmatprep.subr.mxu0 0.0
    %165 = vmatpush1.msra.mxu0 0.0
    %166 = vmatprep.subr.mxu0 0.0
    %167 = vmatpush1.msra.mxu0 0.0
    %168 = vmatprep.subr.mxu0 0.0
    %169 = vmatpush1.msra.mxu0 0.0
    %170 = vmatprep.subr.mxu0 0.0
    %171 = vmatpush1.msra.mxu0 0.0
    %172 = vmatprep.subr.mxu0 0.0
    %173 = vmatpush1.msra.mxu0 0.0
    %174 = vmatprep.subr.mxu0 0.0
    %175 = vmatpush1.msra.mxu0 0.0
    %176 = vmatprep.subr.mxu0 0.0
    %177 = vmatpush1.msra.mxu0 0.0
    %178 = vmatprep.subr.mxu0 0.0
    %179 = vmatpush1.msra.mxu0 0.0
    %180 = vmatprep.subr.mxu0 0.0
    %181 = vmatpush1.msra.mxu0 0.0
    %182 = vmatprep.subr.mxu0 0.0
    %183 = vmatpush1.msra.mxu0 0.0
    %184 = vmatprep.mubr.f32.mxu0 0.0
    %185 = vmatmul.mubr.f32.gmra.mrb[0].mxu0 %v66
    %v186 = vpop.f32.mrb[0].mxu0
    %v187 = vadd.f32 0.0, %v186
    %v188 = vpop.f32.mrb[0].mxu0
    %v189 = vadd.f32 0.0, %v188
    %190 = vmatprep.mubr.f32.mxu0 0.0
    %191 = vmatmul.mubr.f32.gmra.mrb[0].mxu0 %v69
    %v192 = vpop.f32.mrb[0].mxu0
    %v193 = vadd.f32 0.0, %v192
    %v194 = vpop.f32.mrb[0].mxu0
    %v195 = vadd.f32 0.0, %v194
    %196 = vmatprep.mubr.f32.mxu0 0.0
    %197 = vmatmul.mubr.f32.gmra.mrb[0].mxu0 %v72
    %v198 = vpop.f32.mrb[0].mxu0
    %v199 = vadd.f32 0.0, %v198
    %v200 = vpop.f32.mrb[0].mxu0
    %v201 = vadd.f32 0.0, %v200
    %202 = vmatprep.mubr.f32.mxu0 0.0
    %203 = vmatmul.mubr.f32.gmra.mrb[0].mxu0 %v75
    %v204 = vpop.f32.mrb[0].mxu0
    %v205 = vadd.f32 0.0, %v204
    %v206 = vpop.f32.mrb[0].mxu0
    %v207 = vadd.f32 0.0, %v206
    %208 = vmatprep.mubr.f32.mxu0 0.0
    %209 = vmatmul.mubr.f32.gmra.mrb[0].mxu0 %v78
    %v210 = vpop.f32.mrb[0].mxu0
    %v211 = vadd.f32 0.0, %v210
    %v212 = vpop.f32.mrb[0].mxu0
    %v213 = vadd.f32 0.0, %v212
    %214 = vmatprep.mubr.f32.mxu0 0.0
    %215 = vmatmul.mubr.f32.gmra.mrb[0].mxu0 %v81
    %v216 = vpop.f32.mrb[0].mxu0
    %v217 = vadd.f32 0.0, %v216
    %v218 = vpop.f32.mrb[0].mxu0
    %v219 = vadd.f32 0.0, %v218
    %220 = vmatprep.mubr.f32.mxu0 0.0
    %221 = vmatmul.mubr.f32.gmra.mrb[0].mxu0 %v84
    %v222 = vpop.f32.mrb[0].mxu0
    %v223 = vadd.f32 0.0, %v222
    %v224 = vpop.f32.mrb[0].mxu0
    %v225 = vadd.f32 0.0, %v224
    %226 = vmatprep.mubr.f32.mxu0 0.0
    %227 = vmatmul.mubr.f32.gmra.mrb[0].mxu0 %v87
    %v228 = vpop.f32.mrb[0].mxu0
    %v229 = vadd.f32 0.0, %v228
    %v230 = vpop.f32.mrb[0].mxu0
    %v231 = vadd.f32 0.0, %v230
    %232 = vmatprep.mubr.f32.mxu0 0.0
    %233 = vmatmul.mubr.f32.gmra.mrb[0].mxu0 %v90
    %v234 = vpop.f32.mrb[0].mxu0
    %v235 = vadd.f32 0.0, %v234
    %v236 = vpop.f32.mrb[0].mxu0
    %v237 = vadd.f32 0.0, %v236
    %238 = vmatprep.mubr.f32.mxu0 0.0
    %239 = vmatmul.mubr.f32.gmra.mrb[0].mxu0 %v93
    %v240 = vpop.f32.mrb[0].mxu0
    %v241 = vadd.f32 0.0, %v240
    %v242 = vpop.f32.mrb[0].mxu0
    %v243 = vadd.f32 0.0, %v242
    %244 = vmatprep.mubr.f32.mxu0 0.0
    %245 = vmatmul.mubr.f32.gmra.mrb[0].mxu0 %v96
    %v246 = vpop.f32.mrb[0].mxu0
    %v247 = vadd.f32 0.0, %v246
    %v248 = vpop.f32.mrb[0].mxu0
    %v249 = vadd.f32 0.0, %v248
    %250 = vmatprep.mubr.f32.mxu0 0.0
    %251 = vmatmul.mubr.f32.gmra.mrb[0].mxu0 %v99
    %v252 = vpop.f32.mrb[0].mxu0
    %v253 = vadd.f32 0.0, %v252
    %v254 = vpop.f32.mrb[0].mxu0
    %v255 = vadd.f32 0.0, %v254
    %256 = vmatprep.mubr.f32.mxu0 0.0
    %257 = vmatmul.mubr.f32.gmra.mrb[0].mxu0 %v102
    %v258 = vpop.f32.mrb[0].mxu0
    %v259 = vadd.f32 0.0, %v258
    %v260 = vpop.f32.mrb[0].mxu0
    %v261 = vadd.f32 0.0, %v260
    %262 = vmatprep.mubr.f32.mxu0 0.0
    %263 = vmatmul.mubr.f32.gmra.mrb[0].mxu0 %v105
    %v264 = vpop.f32.mrb[0].mxu0
    %v265 = vadd.f32 0.0, %v264
    %v266 = vpop.f32.mrb[0].mxu0
    %v267 = vadd.f32 0.0, %v266
    %268 = vmatprep.mubr.f32.mxu0 0.0
    %269 = vmatmul.mubr.f32.gmra.mrb[0].mxu0 %v108
    %v270 = vpop.f32.mrb[0].mxu0
    %v271 = vadd.f32 0.0, %v270
    %v272 = vpop.f32.mrb[0].mxu0
    %v273 = vadd.f32 0.0, %v272
    %274 = vmatprep.mubr.f32.mxu0 0.0
    %275 = vmatmul.mubr.f32.gmra.mrb[0].mxu0 %v111
    %v276 = vpop.f32.mrb[0].mxu0
    %v277 = vadd.f32 0.0, %v276
    %v278 = vpop.f32.mrb[0].mxu0
    %v279 = vadd.f32 0.0, %v278
    %280 = vdwg.mxu0
    %281 = vmatprep.subr.mxu0 0.0
    %282 = vmatpush1.msra.mxu0 %v118
    %283 = vmatprep.subr.mxu0 0.0
    %284 = vmatpush1.msra.mxu0 0.0
    %285 = vmatprep.subr.mxu0 0.0
    %286 = vmatpush1.msra.mxu0 0.0
    %287 = vmatprep.subr.mxu0 0.0
    %288 = vmatpush1.msra.mxu0 0.0
    %289 = vmatprep.subr.mxu0 0.0
    %290 = vmatpush1.msra.mxu0 0.0
    %291 = vmatprep.subr.mxu0 0.0
    %292 = vmatpush1.msra.mxu0 0.0
    %293 = vmatprep.subr.mxu0 0.0
    %294 = vmatpush1.msra.mxu0 0.0
    %295 = vmatprep.subr.mxu0 0.0
    %296 = vmatpush1.msra.mxu0 0.0
    %297 = vmatprep.subr.mxu0 0.0
    %298 = vmatpush1.msra.mxu0 0.0
    %299 = vmatprep.subr.mxu0 0.0
    %300 = vmatpush1.msra.mxu0 0.0
    %301 = vmatprep.subr.mxu0 0.0
    %302 = vmatpush1.msra.mxu0 0.0
    %303 = vmatprep.subr.mxu0 0.0
    %304 = vmatpush1.msra.mxu0 0.0
    %305 = vmatprep.subr.mxu0 0.0
    %306 = vmatpush1.msra.mxu0 0.0
    %307 = vmatprep.subr.mxu0 0.0
    %308 = vmatpush1.msra.mxu0 0.0
    %309 = vmatprep.subr.mxu0 0.0
    %310 = vmatpush1.msra.mxu0 0.0
    %311 = vmatprep.subr.mxu0 0.0
    %312 = vmatpush1.msra.mxu0 0.0
    %313 = vmatprep.subr.mxu0 0.0
    %314 = vmatpush1.msra.mxu0 0.0
    %315 = vmatprep.subr.mxu0 0.0
    %316 = vmatpush1.msra.mxu0 0.0
    %317 = vmatprep.subr.mxu0 0.0
    %318 = vmatpush1.msra.mxu0 0.0
    %319 = vmatprep.subr.mxu0 0.0
    %320 = vmatpush1.msra.mxu0 0.0
    %321 = vmatprep.subr.mxu0 0.0
    %322 = vmatpush1.msra.mxu0 0.0
    %323 = vmatprep.subr.mxu0 0.0
    %324 = vmatpush1.msra.mxu0 0.0
    %325 = vmatprep.subr.mxu0 0.0
    %326 = vmatpush1.msra.mxu0 0.0
    %327 = vmatprep.subr.mxu0 0.0
    %328 = vmatpush1.msra.mxu0 0.0
    %329 = vmatprep.subr.mxu0 0.0
    %330 = vmatpush1.msra.mxu0 0.0
    %331 = vmatprep.subr.mxu0 0.0
    %332 = vmatpush1.msra.mxu0 0.0
    %333 = vmatprep.subr.mxu0 0.0
    %334 = vmatpush1.msra.mxu0 0.0
    %335 = vmatprep.subr.mxu0 0.0
    %336 = vmatpush1.msra.mxu0 0.0
    %337 = vmatprep.subr.mxu0 0.0
    %338 = vmatpush1.msra.mxu0 0.0
    %339 = vmatprep.subr.mxu0 0.0
    %340 = vmatpush1.msra.mxu0 0.0
    %341 = vmatprep.subr.mxu0 0.0
    %342 = vmatpush1.msra.mxu0 0.0
    %343 = vmatprep.subr.mxu0 0.0
    %344 = vmatpush1.msra.mxu0 0.0
    %345 = vmatprep.mubr.f32.mxu0 0.0
    %346 = vmatmul.mubr.f32.gmra.mrb[0].mxu0 %v66
    %v347 = vpop.f32.mrb[0].mxu0
    %v348 = vadd.f32 0.0, %v347
    %v349 = vpop.f32.mrb[0].mxu0
    %350 = vmatprep.mubr.f32.mxu0 0.0
    %351 = vmatmul.mubr.f32.gmra.mrb[0].mxu0 %v69
    %v352 = vpop.f32.mrb[0].mxu0
    %v353 = vadd.f32 0.0, %v352
    %v354 = vpop.f32.mrb[0].mxu0
    %355 = vmatprep.mubr.f32.mxu0 0.0
    %356 = vmatmul.mubr.f32.gmra.mrb[0].mxu0 %v72
    %v357 = vpop.f32.mrb[0].mxu0
    %v358 = vadd.f32 0.0, %v357
    %v359 = vpop.f32.mrb[0].mxu0
    %360 = vmatprep.mubr.f32.mxu0 0.0
    %361 = vmatmul.mubr.f32.gmra.mrb[0].mxu0 %v75
    %v362 = vpop.f32.mrb[0].mxu0
    %v363 = vadd.f32 0.0, %v362
    %v364 = vpop.f32.mrb[0].mxu0
    %365 = vmatprep.mubr.f32.mxu0 0.0
    %366 = vmatmul.mubr.f32.gmra.mrb[0].mxu0 %v78
    %v367 = vpop.f32.mrb[0].mxu0
    %v368 = vadd.f32 0.0, %v367
    %v369 = vpop.f32.mrb[0].mxu0
    %370 = vmatprep.mubr.f32.mxu0 0.0
    %371 = vmatmul.mubr.f32.gmra.mrb[0].mxu0 %v81
    %v372 = vpop.f32.mrb[0].mxu0
    %v373 = vadd.f32 0.0, %v372
    %v374 = vpop.f32.mrb[0].mxu0
    %375 = vmatprep.mubr.f32.mxu0 0.0
    %376 = vmatmul.mubr.f32.gmra.mrb[0].mxu0 %v84
    %v377 = vpop.f32.mrb[0].mxu0
    %v378 = vadd.f32 0.0, %v377
    %v379 = vpop.f32.mrb[0].mxu0
    %380 = vmatprep.mubr.f32.mxu0 0.0
    %381 = vmatmul.mubr.f32.gmra.mrb[0].mxu0 %v87
    %v382 = vpop.f32.mrb[0].mxu0
    %v383 = vadd.f32 0.0, %v382
    %v384 = vpop.f32.mrb[0].mxu0
    %385 = vmatprep.mubr.f32.mxu0 0.0
    %386 = vmatmul.mubr.f32.gmra.mrb[0].mxu0 %v90
    %v387 = vpop.f32.mrb[0].mxu0
    %v388 = vadd.f32 0.0, %v387
    %v389 = vpop.f32.mrb[0].mxu0
    %390 = vmatprep.mubr.f32.mxu0 0.0
    %391 = vmatmul.mubr.f32.gmra.mrb[0].mxu0 %v93
    %v392 = vpop.f32.mrb[0].mxu0
    %v393 = vadd.f32 0.0, %v392
    %v394 = vpop.f32.mrb[0].mxu0
    %395 = vmatprep.mubr.f32.mxu0 0.0
    %396 = vmatmul.mubr.f32.gmra.mrb[0].mxu0 %v96
    %v397 = vpop.f32.mrb[0].mxu0
    %v398 = vadd.f32 0.0, %v397
    %v399 = vpop.f32.mrb[0].mxu0
    %400 = vmatprep.mubr.f32.mxu0 0.0
    %401 = vmatmul.mubr.f32.gmra.mrb[0].mxu0 %v99
    %v402 = vpop.f32.mrb[0].mxu0
    %v403 = vadd.f32 0.0, %v402
    %v404 = vpop.f32.mrb[0].mxu0
    %405 = vmatprep.mubr.f32.mxu0 0.0
    %406 = vmatmul.mubr.f32.gmra.mrb[0].mxu0 %v102
    %v407 = vpop.f32.mrb[0].mxu0
    %v408 = vadd.f32 0.0, %v407
    %v409 = vpop.f32.mrb[0].mxu0
    %410 = vmatprep.mubr.f32.mxu0 0.0
    %411 = vmatmul.mubr.f32.gmra.mrb[0].mxu0 %v105
    %v412 = vpop.f32.mrb[0].mxu0
    %v413 = vadd.f32 0.0, %v412
    %v414 = vpop.f32.mrb[0].mxu0
    %415 = vmatprep.mubr.f32.mxu0 0.0
    %416 = vmatmul.mubr.f32.gmra.mrb[0].mxu0 %v108
    %v417 = vpop.f32.mrb[0].mxu0
    %v418 = vadd.f32 0.0, %v417
    %v419 = vpop.f32.mrb[0].mxu0
    %420 = vmatprep.mubr.f32.mxu0 0.0
    %421 = vmatmul.mubr.f32.gmra.mrb[0].mxu0 %v111
    %v422 = vpop.f32.mrb[0].mxu0
    %v423 = vadd.f32 0.0, %v422
    %v424 = vpop.f32.mrb[0].mxu0
    %425 = vdwg.mxu0
    %v426 = vmul.f32 %v24, %v24
    %v427 = vmul.f32 %v25, %v25
    %v428 = vmul.f32 %v26, %v26
    %v429 = vmul.f32 %v27, %v27
    %v430 = vmul.f32 %v28, %v28
    %v431 = vmul.f32 %v29, %v29
    %v432 = vmul.f32 %v30, %v30
    %v433 = vmul.f32 %v31, %v31
    %v434 = vmul.f32 %v32, %v32
    %v435 = vmul.f32 %v33, %v33
    %v436 = vmul.f32 %v34, %v34
    %v437 = vmul.f32 %v35, %v35
    %v438 = vmul.f32 %v36, %v36
    %v439 = vmul.f32 %v37, %v37
    %v440 = vmul.f32 %v38, %v38
    %v441 = vmul.f32 %v39, %v39
    %v442 = vsel %vm64, %v426, 0.0
    %443 = vadd.xlane.f32.xlu0 %v442
    %v444 = vpop.xlane.xlu0 %443
    %v445 = vsel %vm64, %v427, 0.0
    %446 = vadd.xlane.f32.xlu0 %v445
    %v447 = vpop.xlane.xlu0 %446
    %v448 = vsel %vm64, %v428, 0.0
    %449 = vadd.xlane.f32.xlu0 %v448
    %v450 = vpop.xlane.xlu0 %449
    %v451 = vsel %vm64, %v429, 0.0
    %452 = vadd.xlane.f32.xlu0 %v451
    %v453 = vpop.xlane.xlu0 %452
    %v454 = vsel %vm64, %v430, 0.0
    %455 = vadd.xlane.f32.xlu0 %v454
    %v456 = vpop.xlane.xlu0 %455
    %v457 = vsel %vm64, %v431, 0.0
    %458 = vadd.xlane.f32.xlu0 %v457
    %v459 = vpop.xlane.xlu0 %458
    %v460 = vsel %vm64, %v432, 0.0
    %461 = vadd.xlane.f32.xlu0 %v460
    %v462 = vpop.xlane.xlu0 %461
    %v463 = vsel %vm64, %v433, 0.0
    %464 = vadd.xlane.f32.xlu0 %v463
    %v465 = vpop.xlane.xlu0 %464
    %v466 = vsel %vm64, %v434, 0.0
    %467 = vadd.xlane.f32.xlu0 %v466
    %v468 = vpop.xlane.xlu0 %467
    %v469 = vsel %vm64, %v435, 0.0
    %470 = vadd.xlane.f32.xlu0 %v469
    %v471 = vpop.xlane.xlu0 %470
    %v472 = vsel %vm64, %v436, 0.0
    %473 = vadd.xlane.f32.xlu0 %v472
    %v474 = vpop.xlane.xlu0 %473
    %v475 = vsel %vm64, %v437, 0.0
    %476 = vadd.xlane.f32.xlu0 %v475
    %v477 = vpop.xlane.xlu0 %476
    %v478 = vsel %vm64, %v438, 0.0
    %479 = vadd.xlane.f32.xlu0 %v478
    %v480 = vpop.xlane.xlu0 %479
    %v481 = vsel %vm64, %v439, 0.0
    %482 = vadd.xlane.f32.xlu0 %v481
    %v483 = vpop.xlane.xlu0 %482
    %v484 = vsel %vm64, %v440, 0.0
    %485 = vadd.xlane.f32.xlu0 %v484
    %v486 = vpop.xlane.xlu0 %485
    %v487 = vsel %vm64, %v441, 0.0
    %488 = vadd.xlane.f32.xlu0 %v487
    %v489 = vpop.xlane.xlu0 %488
    %v490 = vmul.f32 %v444, 0.0078125
    %v491 = vmul.f32 %v447, 0.0078125
    %v492 = vmul.f32 %v450, 0.0078125
    %v493 = vmul.f32 %v453, 0.0078125
    %v494 = vmul.f32 %v456, 0.0078125
    %v495 = vmul.f32 %v459, 0.0078125
    %v496 = vmul.f32 %v462, 0.0078125
    %v497 = vmul.f32 %v465, 0.0078125
    %v498 = vmul.f32 %v468, 0.0078125
    %v499 = vmul.f32 %v471, 0.0078125
    %v500 = vmul.f32 %v474, 0.0078125
    %v501 = vmul.f32 %v477, 0.0078125
    %v502 = vmul.f32 %v480, 0.0078125
    %v503 = vmul.f32 %v483, 0.0078125
    %v504 = vmul.f32 %v486, 0.0078125
    %v505 = vmul.f32 %v489, 0.0078125
    %v506 = vsub.f32 %v187, %v490
    %v507 = vsub.f32 %v189, %v490
    %v508 = vsub.f32 %v193, %v491
    %v509 = vsub.f32 %v195, %v491
    %v510 = vsub.f32 %v199, %v492
    %v511 = vsub.f32 %v201, %v492
    %v512 = vsub.f32 %v205, %v493
    %v513 = vsub.f32 %v207, %v493
    %v514 = vsub.f32 %v211, %v494
    %v515 = vsub.f32 %v213, %v494
    %v516 = vsub.f32 %v217, %v495
    %v517 = vsub.f32 %v219, %v495
    %v518 = vsub.f32 %v223, %v496
    %v519 = vsub.f32 %v225, %v496
    %v520 = vsub.f32 %v229, %v497
    %v521 = vsub.f32 %v231, %v497
    %v522 = vsub.f32 %v235, %v498
    %v523 = vsub.f32 %v237, %v498
    %v524 = vsub.f32 %v241, %v499
    %v525 = vsub.f32 %v243, %v499
    %v526 = vsub.f32 %v247, %v500
    %v527 = vsub.f32 %v249, %v500
    %v528 = vsub.f32 %v253, %v501
    %v529 = vsub.f32 %v255, %v501
    %v530 = vsub.f32 %v259, %v502
    %v531 = vsub.f32 %v261, %v502
    %v532 = vsub.f32 %v265, %v503
    %v533 = vsub.f32 %v267, %v503
    %v534 = vsub.f32 %v271, %v504
    %v535 = vsub.f32 %v273, %v504
    %v536 = vsub.f32 %v277, %v505
    %v537 = vsub.f32 %v279, %v505
    %v539 = vlaneseq
    %v540 = vshrl.u32 %v539, 7
    %v541 = vsub.s32 0, %v540
    %v542 = vrot.slane %v40, %v541
    %v543 = vlaneseq
    %v544 = vshrl.u32 %v543, 7
    %v545 = vsub.s32 1, %v544
    %v546 = vrot.slane %v40, %v545
    %v549 = vsub.f32 %v506, %v542
    %v550 = vsub.f32 %v507, %v546
    %v551 = vsub.f32 %v508, %v542
    %v552 = vsub.f32 %v509, %v546
    %v553 = vsub.f32 %v510, %v542
    %v554 = vsub.f32 %v511, %v546
    %v555 = vsub.f32 %v512, %v542
    %v556 = vsub.f32 %v513, %v546
    %v557 = vsub.f32 %v514, %v542
    %v558 = vsub.f32 %v515, %v546
    %v559 = vsub.f32 %v516, %v542
    %v560 = vsub.f32 %v517, %v546
    %v561 = vsub.f32 %v518, %v542
    %v562 = vsub.f32 %v519, %v546
    %v563 = vsub.f32 %v520, %v542
    %v564 = vsub.f32 %v521, %v546
    %v565 = vsub.f32 %v522, %v542
    %v566 = vsub.f32 %v523, %v546
    %v567 = vsub.f32 %v524, %v542
    %v568 = vsub.f32 %v525, %v546
    %v569 = vsub.f32 %v526, %v542
    %v570 = vsub.f32 %v527, %v546
    %v571 = vsub.f32 %v528, %v542
    %v572 = vsub.f32 %v529, %v546
    %v573 = vsub.f32 %v530, %v542
    %v574 = vsub.f32 %v531, %v546
    %v575 = vsub.f32 %v532, %v542
    %v576 = vsub.f32 %v533, %v546
    %v577 = vsub.f32 %v534, %v542
    %v578 = vsub.f32 %v535, %v546
    %v579 = vsub.f32 %v536, %v542
    %v580 = vsub.f32 %v537, %v546
    %v581 = vmul.f32 %v549, 1.442695
    %v582 = vpow.pop %v581
    %v583 = vmul.f32 %v550, 1.442695
    %v584 = vpow.pop %v583
    %v585 = vmul.f32 %v551, 1.442695
    %v586 = vpow.pop %v585
    %v587 = vmul.f32 %v552, 1.442695
    %v588 = vpow.pop %v587
    %v589 = vmul.f32 %v553, 1.442695
    %v590 = vpow.pop %v589
    %v591 = vmul.f32 %v554, 1.442695
    %v592 = vpow.pop %v591
    %v593 = vmul.f32 %v555, 1.442695
    %v594 = vpow.pop %v593
    %v595 = vmul.f32 %v556, 1.442695
    %v596 = vpow.pop %v595
    %v597 = vmul.f32 %v557, 1.442695
    %v598 = vpow.pop %v597
    %v599 = vmul.f32 %v558, 1.442695
    %v600 = vpow.pop %v599
    %v601 = vmul.f32 %v559, 1.442695
    %v602 = vpow.pop %v601
    %v603 = vmul.f32 %v560, 1.442695
    %v604 = vpow.pop %v603
    %v605 = vmul.f32 %v561, 1.442695
    %v606 = vpow.pop %v605
    %v607 = vmul.f32 %v562, 1.442695
    %v608 = vpow.pop %v607
    %v609 = vmul.f32 %v563, 1.442695
    %v610 = vpow.pop %v609
    %v611 = vmul.f32 %v564, 1.442695
    %v612 = vpow.pop %v611
    %v613 = vmul.f32 %v565, 1.442695
    %v614 = vpow.pop %v613
    %v615 = vmul.f32 %v566, 1.442695
    %v616 = vpow.pop %v615
    %v617 = vmul.f32 %v567, 1.442695
    %v618 = vpow.pop %v617
    %v619 = vmul.f32 %v568, 1.442695
    %v620 = vpow.pop %v619
    %v621 = vmul.f32 %v569, 1.442695
    %v622 = vpow.pop %v621
    %v623 = vmul.f32 %v570, 1.442695
    %v624 = vpow.pop %v623
    %v625 = vmul.f32 %v571, 1.442695
    %v626 = vpow.pop %v625
    %v627 = vmul.f32 %v572, 1.442695
    %v628 = vpow.pop %v627
    %v629 = vmul.f32 %v573, 1.442695
    %v630 = vpow.pop %v629
    %v631 = vmul.f32 %v574, 1.442695
    %v632 = vpow.pop %v631
    %v633 = vmul.f32 %v575, 1.442695
    %v634 = vpow.pop %v633
    %v635 = vmul.f32 %v576, 1.442695
    %v636 = vpow.pop %v635
    %v637 = vmul.f32 %v577, 1.442695
    %v638 = vpow.pop %v637
    %v639 = vmul.f32 %v578, 1.442695
    %v640 = vpow.pop %v639
    %v641 = vmul.f32 %v579, 1.442695
    %v642 = vpow.pop %v641
    %v643 = vmul.f32 %v580, 1.442695
    %v644 = vpow.pop %v643
    %v645 = vld [vmem:[%s2] sm:$0xff]
    %v646 = vld [vmem:[%s2 + $0x8] sm:$0xff]
    %v647 = vld [vmem:[%s2 + $0x10] sm:$0xff]
    %v648 = vld [vmem:[%s2 + $0x18] sm:$0xff]
    %v649 = vld [vmem:[%s2 + $0x20] sm:$0xff]
    %v650 = vld [vmem:[%s2 + $0x28] sm:$0xff]
    %v651 = vld [vmem:[%s2 + $0x30] sm:$0xff]
    %v652 = vld [vmem:[%s2 + $0x38] sm:$0xff]
    %v653 = vld [vmem:[%s2 + $0x40] sm:$0xff]
    %v654 = vld [vmem:[%s2 + $0x48] sm:$0xff]
    %v655 = vld [vmem:[%s2 + $0x50] sm:$0xff]
    %v656 = vld [vmem:[%s2 + $0x58] sm:$0xff]
    %v657 = vld [vmem:[%s2 + $0x60] sm:$0xff]
    %v658 = vld [vmem:[%s2 + $0x68] sm:$0xff]
    %v659 = vld [vmem:[%s2 + $0x70] sm:$0xff]
    %v660 = vld [vmem:[%s2 + $0x78] sm:$0xff]
    %v661 = vld [vmem:[%s2 + $0x80] sm:$0xff]
    %v662 = vld [vmem:[%s2 + $0x88] sm:$0xff]
    %v663 = vld [vmem:[%s2 + $0x90] sm:$0xff]
    %v664 = vld [vmem:[%s2 + $0x98] sm:$0xff]
    %v665 = vld [vmem:[%s2 + $0xa0] sm:$0xff]
    %v666 = vld [vmem:[%s2 + $0xa8] sm:$0xff]
    %v667 = vld [vmem:[%s2 + $0xb0] sm:$0xff]
    %v668 = vld [vmem:[%s2 + $0xb8] sm:$0xff]
    %v669 = vld [vmem:[%s2 + $0xc0] sm:$0xff]
    %v670 = vld [vmem:[%s2 + $0xc8] sm:$0xff]
    %v671 = vld [vmem:[%s2 + $0xd0] sm:$0xff]
    %v672 = vld [vmem:[%s2 + $0xd8] sm:$0xff]
    %v673 = vld [vmem:[%s2 + $0xe0] sm:$0xff]
    %v674 = vld [vmem:[%s2 + $0xe8] sm:$0xff]
    %v675 = vld [vmem:[%s2 + $0xf0] sm:$0xff]
    %v676 = vld [vmem:[%s2 + $0xf8] sm:$0xff]
    %677 = vmatprep.subr.mxu0 0.0
    %678 = vmatpush1.msra.mxu0 %v645
    %679 = vmatprep.subr.mxu0 0.0
    %680 = vmatpush1.msra.mxu0 %v646
    %681 = vmatprep.subr.mxu0 0.0
    %682 = vmatpush1.msra.mxu0 %v647
    %683 = vmatprep.subr.mxu0 0.0
    %684 = vmatpush1.msra.mxu0 %v648
    %685 = vmatprep.subr.mxu0 0.0
    %686 = vmatpush1.msra.mxu0 %v649
    %687 = vmatprep.subr.mxu0 0.0
    %688 = vmatpush1.msra.mxu0 %v650
    %689 = vmatprep.subr.mxu0 0.0
    %690 = vmatpush1.msra.mxu0 %v651
    %691 = vmatprep.subr.mxu0 0.0
    %692 = vmatpush1.msra.mxu0 %v652
    %693 = vmatprep.subr.mxu0 0.0
    %694 = vmatpush1.msra.mxu0 %v653
    %695 = vmatprep.subr.mxu0 0.0
    %696 = vmatpush1.msra.mxu0 %v654
    %697 = vmatprep.subr.mxu0 0.0
    %698 = vmatpush1.msra.mxu0 %v655
    %699 = vmatprep.subr.mxu0 0.0
    %700 = vmatpush1.msra.mxu0 %v656
    %701 = vmatprep.subr.mxu0 0.0
    %702 = vmatpush1.msra.mxu0 %v657
    %703 = vmatprep.subr.mxu0 0.0
    %704 = vmatpush1.msra.mxu0 %v658
    %705 = vmatprep.subr.mxu0 0.0
    %706 = vmatpush1.msra.mxu0 %v659
    %707 = vmatprep.subr.mxu0 0.0
    %708 = vmatpush1.msra.mxu0 %v660
    %709 = vmatprep.subr.mxu0 0.0
    %710 = vmatpush1.msra.mxu0 %v661
    %711 = vmatprep.subr.mxu0 0.0
    %712 = vmatpush1.msra.mxu0 %v662
    %713 = vmatprep.subr.mxu0 0.0
    %714 = vmatpush1.msra.mxu0 %v663
    %715 = vmatprep.subr.mxu0 0.0
    %716 = vmatpush1.msra.mxu0 %v664
    %717 = vmatprep.subr.mxu0 0.0
    %718 = vmatpush1.msra.mxu0 %v665
    %719 = vmatprep.subr.mxu0 0.0
    %720 = vmatpush1.msra.mxu0 %v666
    %721 = vmatprep.subr.mxu0 0.0
    %722 = vmatpush1.msra.mxu0 %v667
    %723 = vmatprep.subr.mxu0 0.0
    %724 = vmatpush1.msra.mxu0 %v668
    %725 = vmatprep.subr.mxu0 0.0
    %726 = vmatpush1.msra.mxu0 %v669
    %727 = vmatprep.subr.mxu0 0.0
    %728 = vmatpush1.msra.mxu0 %v670
    %729 = vmatprep.subr.mxu0 0.0
    %730 = vmatpush1.msra.mxu0 %v671
    %731 = vmatprep.subr.mxu0 0.0
    %732 = vmatpush1.msra.mxu0 %v672
    %733 = vmatprep.subr.mxu0 0.0
    %734 = vmatpush1.msra.mxu0 %v673
    %735 = vmatprep.subr.mxu0 0.0
    %736 = vmatpush1.msra.mxu0 %v674
    %737 = vmatprep.subr.mxu0 0.0
    %738 = vmatpush1.msra.mxu0 %v675
    %739 = vmatprep.subr.mxu0 0.0
    %740 = vmatpush1.msra.mxu0 %v676
    %741 = vmatprep.mubr.f32.mxu0 %v584
    %742 = vmatmul.mubr.f32.gmra.mrb[0].mxu0 %v582
    %v743 = vpop.f32.mrb[0].mxu0
    %v744 = vadd.f32 0.0, %v743
    %v745 = vpop.f32.mrb[0].mxu0
    %746 = vmatprep.mubr.f32.mxu0 %v588
    %747 = vmatmul.mubr.f32.gmra.mrb[0].mxu0 %v586
    %v748 = vpop.f32.mrb[0].mxu0
    %v749 = vadd.f32 0.0, %v748
    %v750 = vpop.f32.mrb[0].mxu0
    %751 = vmatprep.mubr.f32.mxu0 %v592
    %752 = vmatmul.mubr.f32.gmra.mrb[0].mxu0 %v590
    %v753 = vpop.f32.mrb[0].mxu0
    %v754 = vadd.f32 0.0, %v753
    %v755 = vpop.f32.mrb[0].mxu0
    %756 = vmatprep.mubr.f32.mxu0 %v596
    %757 = vmatmul.mubr.f32.gmra.mrb[0].mxu0 %v594
    %v758 = vpop.f32.mrb[0].mxu0
    %v759 = vadd.f32 0.0, %v758
    %v760 = vpop.f32.mrb[0].mxu0
    %761 = vmatprep.mubr.f32.mxu0 %v600
    %762 = vmatmul.mubr.f32.gmra.mrb[0].mxu0 %v598
    %v763 = vpop.f32.mrb[0].mxu0
    %v764 = vadd.f32 0.0, %v763
    %v765 = vpop.f32.mrb[0].mxu0
    %766 = vmatprep.mubr.f32.mxu0 %v604
    %767 = vmatmul.mubr.f32.gmra.mrb[0].mxu0 %v602
    %v768 = vpop.f32.mrb[0].mxu0
    %v769 = vadd.f32 0.0, %v768
    %v770 = vpop.f32.mrb[0].mxu0
    %771 = vmatprep.mubr.f32.mxu0 %v608
    %772 = vmatmul.mubr.f32.gmra.mrb[0].mxu0 %v606
    %v773 = vpop.f32.mrb[0].mxu0
    %v774 = vadd.f32 0.0, %v773
    %v775 = vpop.f32.mrb[0].mxu0
    %776 = vmatprep.mubr.f32.mxu0 %v612
    %777 = vmatmul.mubr.f32.gmra.mrb[0].mxu0 %v610
    %v778 = vpop.f32.mrb[0].mxu0
    %v779 = vadd.f32 0.0, %v778
    %v780 = vpop.f32.mrb[0].mxu0
    %781 = vmatprep.mubr.f32.mxu0 %v616
    %782 = vmatmul.mubr.f32.gmra.mrb[0].mxu0 %v614
    %v783 = vpop.f32.mrb[0].mxu0
    %v784 = vadd.f32 0.0, %v783
    %v785 = vpop.f32.mrb[0].mxu0
    %786 = vmatprep.mubr.f32.mxu0 %v620
    %787 = vmatmul.mubr.f32.gmra.mrb[0].mxu0 %v618
    %v788 = vpop.f32.mrb[0].mxu0
    %v789 = vadd.f32 0.0, %v788
    %v790 = vpop.f32.mrb[0].mxu0
    %791 = vmatprep.mubr.f32.mxu0 %v624
    %792 = vmatmul.mubr.f32.gmra.mrb[0].mxu0 %v622
    %v793 = vpop.f32.mrb[0].mxu0
    %v794 = vadd.f32 0.0, %v793
    %v795 = vpop.f32.mrb[0].mxu0
    %796 = vmatprep.mubr.f32.mxu0 %v628
    %797 = vmatmul.mubr.f32.gmra.mrb[0].mxu0 %v626
    %v798 = vpop.f32.mrb[0].mxu0
    %v799 = vadd.f32 0.0, %v798
    %v800 = vpop.f32.mrb[0].mxu0
    %801 = vmatprep.mubr.f32.mxu0 %v632
    %802 = vmatmul.mubr.f32.gmra.mrb[0].mxu0 %v630
    %v803 = vpop.f32.mrb[0].mxu0
    %v804 = vadd.f32 0.0, %v803
    %v805 = vpop.f32.mrb[0].mxu0
    %806 = vmatprep.mubr.f32.mxu0 %v636
    %807 = vmatmul.mubr.f32.gmra.mrb[0].mxu0 %v634
    %v808 = vpop.f32.mrb[0].mxu0
    %v809 = vadd.f32 0.0, %v808
    %v810 = vpop.f32.mrb[0].mxu0
    %811 = vmatprep.mubr.f32.mxu0 %v640
    %812 = vmatmul.mubr.f32.gmra.mrb[0].mxu0 %v638
    %v813 = vpop.f32.mrb[0].mxu0
    %v814 = vadd.f32 0.0, %v813
    %v815 = vpop.f32.mrb[0].mxu0
    %816 = vmatprep.mubr.f32.mxu0 %v644
    %817 = vmatmul.mubr.f32.gmra.mrb[0].mxu0 %v642
    %v818 = vpop.f32.mrb[0].mxu0
    %v819 = vadd.f32 0.0, %v818
    %v820 = vpop.f32.mrb[0].mxu0
    %821 = vdwg.mxu0
    %v822 = vadd.f32 %v348, %v744
    %v823 = vadd.f32 %v353, %v749
    %v824 = vadd.f32 %v358, %v754
    %v825 = vadd.f32 %v363, %v759
    %v826 = vadd.f32 %v368, %v764
    %v827 = vadd.f32 %v373, %v769
    %v828 = vadd.f32 %v378, %v774
    %v829 = vadd.f32 %v383, %v779
    %v830 = vadd.f32 %v388, %v784
    %v831 = vadd.f32 %v393, %v789
    %v832 = vadd.f32 %v398, %v794
    %v833 = vadd.f32 %v403, %v799
    %v834 = vadd.f32 %v408, %v804
    %v835 = vadd.f32 %v413, %v809
    %v836 = vadd.f32 %v418, %v814
    %v837 = vadd.f32 %v423, %v819
    %vm838 = vcmask 523264
    %v839 = vsel %vm838, %v822, 0.0
    %v840 = vsel %vm838, %v823, 0.0
    %v841 = vadd.f32 %v839, %v840
    %v842 = vsel %vm838, %v824, 0.0
    %v843 = vadd.f32 %v841, %v842
    %v844 = vsel %vm838, %v825, 0.0
    %v845 = vadd.f32 %v843, %v844
    %v846 = vsel %vm838, %v826, 0.0
    %v847 = vadd.f32 %v845, %v846
    %v848 = vsel %vm838, %v827, 0.0
    %v849 = vadd.f32 %v847, %v848
    %v850 = vsel %vm838, %v828, 0.0
    %v851 = vadd.f32 %v849, %v850
    %v852 = vsel %vm838, %v829, 0.0
    %v853 = vadd.f32 %v851, %v852
    %v854 = vsel %vm838, %v830, 0.0
    %v855 = vadd.f32 %v853, %v854
    %v856 = vsel %vm838, %v831, 0.0
    %v857 = vadd.f32 %v855, %v856
    %v858 = vsel %vm838, %v832, 0.0
    %v859 = vadd.f32 %v857, %v858
    %v860 = vsel %vm838, %v833, 0.0
    %v861 = vadd.f32 %v859, %v860
    %v862 = vsel %vm838, %v834, 0.0
    %v863 = vadd.f32 %v861, %v862
    %v864 = vsel %vm838, %v835, 0.0
    %v865 = vadd.f32 %v863, %v864
    %v866 = vsel %vm838, %v836, 0.0
    %v867 = vadd.f32 %v865, %v866
    %v868 = vsel %vm838, %v837, 0.0
    %v869 = vadd.f32 %v867, %v868
    %v870 = vrot.slane %v869, 4
    %v871 = vadd.f32 %v869, %v870
    %v872 = vrot.slane %v871, 2
    %v873 = vadd.f32 %v871, %v872
    %v874 = vrot.slane %v873, 1
    %v875 = vadd.f32 %v873, %v874
    %v876 = vmul.f32 %v822, %v822
    %v877 = vmul.f32 %v823, %v823
    %v878 = vmul.f32 %v824, %v824
    %v879 = vmul.f32 %v825, %v825
    %v880 = vmul.f32 %v826, %v826
    %v881 = vmul.f32 %v827, %v827
    %v882 = vmul.f32 %v828, %v828
    %v883 = vmul.f32 %v829, %v829
    %v884 = vmul.f32 %v830, %v830
    %v885 = vmul.f32 %v831, %v831
    %v886 = vmul.f32 %v832, %v832
    %v887 = vmul.f32 %v833, %v833
    %v888 = vmul.f32 %v834, %v834
    %v889 = vmul.f32 %v835, %v835
    %v890 = vmul.f32 %v836, %v836
    %v891 = vmul.f32 %v837, %v837
    %v892 = vsel %vm838, %v876, 0.0
    %v893 = vsel %vm838, %v877, 0.0
    %v894 = vadd.f32 %v892, %v893
    %v895 = vsel %vm838, %v878, 0.0
    %v896 = vadd.f32 %v894, %v895
    %v897 = vsel %vm838, %v879, 0.0
    %v898 = vadd.f32 %v896, %v897
    %v899 = vsel %vm838, %v880, 0.0
    %v900 = vadd.f32 %v898, %v899
    %v901 = vsel %vm838, %v881, 0.0
    %v902 = vadd.f32 %v900, %v901
    %v903 = vsel %vm838, %v882, 0.0
    %v904 = vadd.f32 %v902, %v903
    %v905 = vsel %vm838, %v883, 0.0
    %v906 = vadd.f32 %v904, %v905
    %v907 = vsel %vm838, %v884, 0.0
    %v908 = vadd.f32 %v906, %v907
    %v909 = vsel %vm838, %v885, 0.0
    %v910 = vadd.f32 %v908, %v909
    %v911 = vsel %vm838, %v886, 0.0
    %v912 = vadd.f32 %v910, %v911
    %v913 = vsel %vm838, %v887, 0.0
    %v914 = vadd.f32 %v912, %v913
    %v915 = vsel %vm838, %v888, 0.0
    %v916 = vadd.f32 %v914, %v915
    %v917 = vsel %vm838, %v889, 0.0
    %v918 = vadd.f32 %v916, %v917
    %v919 = vsel %vm838, %v890, 0.0
    %v920 = vadd.f32 %v918, %v919
    %v921 = vsel %vm838, %v891, 0.0
    %v922 = vadd.f32 %v920, %v921
    %v923 = vrot.slane %v922, 4
    %v924 = vadd.f32 %v922, %v923
    %v925 = vrot.slane %v924, 2
    %v926 = vadd.f32 %v924, %v925
    %v927 = vrot.slane %v926, 1
    %v928 = vadd.f32 %v926, %v927
    %v929 = vmul.f32 %v875, 0.0078125
    %v930 = vmul.f32 %v928, 0.0078125
    %v931 = vmul.f32 %v929, %v929
    %v932 = vsub.f32 %v930, %v931
    %v933 = vmax.f32 %v932, 0.0
    %v934 = vadd.f32 %v933, 1e-05
    %v935 = vrsqrt.pop %v934
    %v936 = vmul.f32 %v41, %v935
    %v937 = vmul.f32 %v929, %v936
    %v938 = vsub.f32 %v42, %v937
    %v939 = vmul.f32 %v822, %v936
    %v940 = vmul.f32 %v823, %v936
    %v941 = vmul.f32 %v824, %v936
    %v942 = vmul.f32 %v825, %v936
    %v943 = vmul.f32 %v826, %v936
    %v944 = vmul.f32 %v827, %v936
    %v945 = vmul.f32 %v828, %v936
    %v946 = vmul.f32 %v829, %v936
    %v947 = vmul.f32 %v830, %v936
    %v948 = vmul.f32 %v831, %v936
    %v949 = vmul.f32 %v832, %v936
    %v950 = vmul.f32 %v833, %v936
    %v951 = vmul.f32 %v834, %v936
    %v952 = vmul.f32 %v835, %v936
    %v953 = vmul.f32 %v836, %v936
    %v954 = vmul.f32 %v837, %v936
    %v955 = vadd.f32 %v939, %v938
    %v956 = vadd.f32 %v940, %v938
    %v957 = vadd.f32 %v941, %v938
    %v958 = vadd.f32 %v942, %v938
    %v959 = vadd.f32 %v943, %v938
    %v960 = vadd.f32 %v944, %v938
    %v961 = vadd.f32 %v945, %v938
    %v962 = vadd.f32 %v946, %v938
    %v963 = vadd.f32 %v947, %v938
    %v964 = vadd.f32 %v948, %v938
    %v965 = vadd.f32 %v949, %v938
    %v966 = vadd.f32 %v950, %v938
    %v967 = vadd.f32 %v951, %v938
    %v968 = vadd.f32 %v952, %v938
    %v969 = vadd.f32 %v953, %v938
    %v970 = vadd.f32 %v954, %v938
    %v971 = vmax.f32 %v955, 0.0
    %v972 = vmax.f32 %v956, 0.0
    %v973 = vmax.f32 %v957, 0.0
    %v974 = vmax.f32 %v958, 0.0
    %v975 = vmax.f32 %v959, 0.0
    %v976 = vmax.f32 %v960, 0.0
    %v977 = vmax.f32 %v961, 0.0
    %v978 = vmax.f32 %v962, 0.0
    %v979 = vmax.f32 %v963, 0.0
    %v980 = vmax.f32 %v964, 0.0
    %v981 = vmax.f32 %v965, 0.0
    %v982 = vmax.f32 %v966, 0.0
    %v983 = vmax.f32 %v967, 0.0
    %v984 = vmax.f32 %v968, 0.0
    %v985 = vmax.f32 %v969, 0.0
    %v986 = vmax.f32 %v970, 0.0
    %v987 = vld [vmem:[%s3] sm:$0xff]
    %v988 = vld [vmem:[%s3 + $0x8] sm:$0xff]
    %v989 = vld [vmem:[%s3 + $0x10] sm:$0xff]
    %v990 = vld [vmem:[%s3 + $0x18] sm:$0xff]
    %v991 = vld [vmem:[%s3 + $0x20] sm:$0xff]
    %v992 = vld [vmem:[%s3 + $0x28] sm:$0xff]
    %v993 = vld [vmem:[%s3 + $0x30] sm:$0xff]
    %v994 = vld [vmem:[%s3 + $0x38] sm:$0xff]
    %v996 = vsel %vm838, %v971, 0
    %v999 = vsel %vm838, %v972, 0
    %v1002 = vsel %vm838, %v973, 0
    %v1005 = vsel %vm838, %v974, 0
    %v1008 = vsel %vm838, %v975, 0
    %v1011 = vsel %vm838, %v976, 0
    %v1014 = vsel %vm838, %v977, 0
    %v1017 = vsel %vm838, %v978, 0
    %v1020 = vsel %vm838, %v979, 0
    %v1023 = vsel %vm838, %v980, 0
    %v1026 = vsel %vm838, %v981, 0
    %v1029 = vsel %vm838, %v982, 0
    %v1032 = vsel %vm838, %v983, 0
    %v1035 = vsel %vm838, %v984, 0
    %v1038 = vsel %vm838, %v985, 0
    %v1041 = vsel %vm838, %v986, 0
    %1043 = vmatprep.subr.mxu0 0.0
    %1044 = vmatpush1.msra.mxu0 %v987
    %1045 = vmatprep.subr.mxu0 0.0
    %1046 = vmatpush1.msra.mxu0 %v988
    %1047 = vmatprep.subr.mxu0 0.0
    %1048 = vmatpush1.msra.mxu0 %v989
    %1049 = vmatprep.subr.mxu0 0.0
    %1050 = vmatpush1.msra.mxu0 %v990
    %1051 = vmatprep.subr.mxu0 0.0
    %1052 = vmatpush1.msra.mxu0 %v991
    %1053 = vmatprep.subr.mxu0 0.0
    %1054 = vmatpush1.msra.mxu0 %v992
    %1055 = vmatprep.subr.mxu0 0.0
    %1056 = vmatpush1.msra.mxu0 %v993
    %1057 = vmatprep.subr.mxu0 0.0
    %1058 = vmatpush1.msra.mxu0 %v994
    %1059 = vmatprep.subr.mxu0 0.0
    %1060 = vmatpush1.msra.mxu0 0.0
    %1061 = vmatprep.subr.mxu0 0.0
    %1062 = vmatpush1.msra.mxu0 0.0
    %1063 = vmatprep.subr.mxu0 0.0
    %1064 = vmatpush1.msra.mxu0 0.0
    %1065 = vmatprep.subr.mxu0 0.0
    %1066 = vmatpush1.msra.mxu0 0.0
    %1067 = vmatprep.subr.mxu0 0.0
    %1068 = vmatpush1.msra.mxu0 0.0
    %1069 = vmatprep.subr.mxu0 0.0
    %1070 = vmatpush1.msra.mxu0 0.0
    %1071 = vmatprep.subr.mxu0 0.0
    %1072 = vmatpush1.msra.mxu0 0.0
    %1073 = vmatprep.subr.mxu0 0.0
    %1074 = vmatpush1.msra.mxu0 0.0
    %1075 = vmatprep.subr.mxu0 0.0
    %1076 = vmatpush1.msra.mxu0 0.0
    %1077 = vmatprep.subr.mxu0 0.0
    %1078 = vmatpush1.msra.mxu0 0.0
    %1079 = vmatprep.subr.mxu0 0.0
    %1080 = vmatpush1.msra.mxu0 0.0
    %1081 = vmatprep.subr.mxu0 0.0
    %1082 = vmatpush1.msra.mxu0 0.0
    %1083 = vmatprep.subr.mxu0 0.0
    %1084 = vmatpush1.msra.mxu0 0.0
    %1085 = vmatprep.subr.mxu0 0.0
    %1086 = vmatpush1.msra.mxu0 0.0
    %1087 = vmatprep.subr.mxu0 0.0
    %1088 = vmatpush1.msra.mxu0 0.0
    %1089 = vmatprep.subr.mxu0 0.0
    %1090 = vmatpush1.msra.mxu0 0.0
    %1091 = vmatprep.subr.mxu0 0.0
    %1092 = vmatpush1.msra.mxu0 0.0
    %1093 = vmatprep.subr.mxu0 0.0
    %1094 = vmatpush1.msra.mxu0 0.0
    %1095 = vmatprep.subr.mxu0 0.0
    %1096 = vmatpush1.msra.mxu0 0.0
    %1097 = vmatprep.subr.mxu0 0.0
    %1098 = vmatpush1.msra.mxu0 0.0
    %1099 = vmatprep.subr.mxu0 0.0
    %1100 = vmatpush1.msra.mxu0 0.0
    %1101 = vmatprep.subr.mxu0 0.0
    %1102 = vmatpush1.msra.mxu0 0.0
    %1103 = vmatprep.subr.mxu0 0.0
    %1104 = vmatpush1.msra.mxu0 0.0
    %1105 = vmatprep.subr.mxu0 0.0
    %1106 = vmatpush1.msra.mxu0 0.0
    %1107 = vmatprep.mubr.f32.mxu0 0.0
    %1108 = vmatmul.mubr.f32.gmra.mrb[0].mxu0 %v996
    %v1109 = vpop.f32.mrb[0].mxu0
    %v1110 = vadd.f32 0.0, %v1109
    %v1111 = vpop.f32.mrb[0].mxu0
    %1112 = vmatprep.mubr.f32.mxu0 0.0
    %1113 = vmatmul.mubr.f32.gmra.mrb[0].mxu0 %v999
    %v1114 = vpop.f32.mrb[0].mxu0
    %v1115 = vadd.f32 0.0, %v1114
    %v1116 = vpop.f32.mrb[0].mxu0
    %1117 = vmatprep.mubr.f32.mxu0 0.0
    %1118 = vmatmul.mubr.f32.gmra.mrb[0].mxu0 %v1002
    %v1119 = vpop.f32.mrb[0].mxu0
    %v1120 = vadd.f32 0.0, %v1119
    %v1121 = vpop.f32.mrb[0].mxu0
    %1122 = vmatprep.mubr.f32.mxu0 0.0
    %1123 = vmatmul.mubr.f32.gmra.mrb[0].mxu0 %v1005
    %v1124 = vpop.f32.mrb[0].mxu0
    %v1125 = vadd.f32 0.0, %v1124
    %v1126 = vpop.f32.mrb[0].mxu0
    %1127 = vmatprep.mubr.f32.mxu0 0.0
    %1128 = vmatmul.mubr.f32.gmra.mrb[0].mxu0 %v1008
    %v1129 = vpop.f32.mrb[0].mxu0
    %v1130 = vadd.f32 0.0, %v1129
    %v1131 = vpop.f32.mrb[0].mxu0
    %1132 = vmatprep.mubr.f32.mxu0 0.0
    %1133 = vmatmul.mubr.f32.gmra.mrb[0].mxu0 %v1011
    %v1134 = vpop.f32.mrb[0].mxu0
    %v1135 = vadd.f32 0.0, %v1134
    %v1136 = vpop.f32.mrb[0].mxu0
    %1137 = vmatprep.mubr.f32.mxu0 0.0
    %1138 = vmatmul.mubr.f32.gmra.mrb[0].mxu0 %v1014
    %v1139 = vpop.f32.mrb[0].mxu0
    %v1140 = vadd.f32 0.0, %v1139
    %v1141 = vpop.f32.mrb[0].mxu0
    %1142 = vmatprep.mubr.f32.mxu0 0.0
    %1143 = vmatmul.mubr.f32.gmra.mrb[0].mxu0 %v1017
    %v1144 = vpop.f32.mrb[0].mxu0
    %v1145 = vadd.f32 0.0, %v1144
    %v1146 = vpop.f32.mrb[0].mxu0
    %1147 = vmatprep.mubr.f32.mxu0 0.0
    %1148 = vmatmul.mubr.f32.gmra.mrb[0].mxu0 %v1020
    %v1149 = vpop.f32.mrb[0].mxu0
    %v1150 = vadd.f32 0.0, %v1149
    %v1151 = vpop.f32.mrb[0].mxu0
    %1152 = vmatprep.mubr.f32.mxu0 0.0
    %1153 = vmatmul.mubr.f32.gmra.mrb[0].mxu0 %v1023
    %v1154 = vpop.f32.mrb[0].mxu0
    %v1155 = vadd.f32 0.0, %v1154
    %v1156 = vpop.f32.mrb[0].mxu0
    %1157 = vmatprep.mubr.f32.mxu0 0.0
    %1158 = vmatmul.mubr.f32.gmra.mrb[0].mxu0 %v1026
    %v1159 = vpop.f32.mrb[0].mxu0
    %v1160 = vadd.f32 0.0, %v1159
    %v1161 = vpop.f32.mrb[0].mxu0
    %1162 = vmatprep.mubr.f32.mxu0 0.0
    %1163 = vmatmul.mubr.f32.gmra.mrb[0].mxu0 %v1029
    %v1164 = vpop.f32.mrb[0].mxu0
    %v1165 = vadd.f32 0.0, %v1164
    %v1166 = vpop.f32.mrb[0].mxu0
    %1167 = vmatprep.mubr.f32.mxu0 0.0
    %1168 = vmatmul.mubr.f32.gmra.mrb[0].mxu0 %v1032
    %v1169 = vpop.f32.mrb[0].mxu0
    %v1170 = vadd.f32 0.0, %v1169
    %v1171 = vpop.f32.mrb[0].mxu0
    %1172 = vmatprep.mubr.f32.mxu0 0.0
    %1173 = vmatmul.mubr.f32.gmra.mrb[0].mxu0 %v1035
    %v1174 = vpop.f32.mrb[0].mxu0
    %v1175 = vadd.f32 0.0, %v1174
    %v1176 = vpop.f32.mrb[0].mxu0
    %1177 = vmatprep.mubr.f32.mxu0 0.0
    %1178 = vmatmul.mubr.f32.gmra.mrb[0].mxu0 %v1038
    %v1179 = vpop.f32.mrb[0].mxu0
    %v1180 = vadd.f32 0.0, %v1179
    %v1181 = vpop.f32.mrb[0].mxu0
    %1182 = vmatprep.mubr.f32.mxu0 0.0
    %1183 = vmatmul.mubr.f32.gmra.mrb[0].mxu0 %v1041
    %v1184 = vpop.f32.mrb[0].mxu0
    %v1185 = vadd.f32 0.0, %v1184
    %v1186 = vpop.f32.mrb[0].mxu0
    %1187 = vdwg.mxu0
    %v1188 = vsel %vm838, %v1110, 0.0
    %v1189 = vsel %vm838, %v1115, 0.0
    %v1190 = vadd.f32 %v1188, %v1189
    %v1191 = vsel %vm838, %v1120, 0.0
    %v1192 = vadd.f32 %v1190, %v1191
    %v1193 = vsel %vm838, %v1125, 0.0
    %v1194 = vadd.f32 %v1192, %v1193
    %v1195 = vsel %vm838, %v1130, 0.0
    %v1196 = vadd.f32 %v1194, %v1195
    %v1197 = vsel %vm838, %v1135, 0.0
    %v1198 = vadd.f32 %v1196, %v1197
    %v1199 = vsel %vm838, %v1140, 0.0
    %v1200 = vadd.f32 %v1198, %v1199
    %v1201 = vsel %vm838, %v1145, 0.0
    %v1202 = vadd.f32 %v1200, %v1201
    %v1203 = vsel %vm838, %v1150, 0.0
    %v1204 = vadd.f32 %v1202, %v1203
    %v1205 = vsel %vm838, %v1155, 0.0
    %v1206 = vadd.f32 %v1204, %v1205
    %v1207 = vsel %vm838, %v1160, 0.0
    %v1208 = vadd.f32 %v1206, %v1207
    %v1209 = vsel %vm838, %v1165, 0.0
    %v1210 = vadd.f32 %v1208, %v1209
    %v1211 = vsel %vm838, %v1170, 0.0
    %v1212 = vadd.f32 %v1210, %v1211
    %v1213 = vsel %vm838, %v1175, 0.0
    %v1214 = vadd.f32 %v1212, %v1213
    %v1215 = vsel %vm838, %v1180, 0.0
    %v1216 = vadd.f32 %v1214, %v1215
    %v1217 = vsel %vm838, %v1185, 0.0
    %v1218 = vadd.f32 %v1216, %v1217
    %v1219 = vrot.slane %v1218, 4
    %v1220 = vadd.f32 %v1218, %v1219
    %v1221 = vrot.slane %v1220, 2
    %v1222 = vadd.f32 %v1220, %v1221
    %v1223 = vrot.slane %v1222, 1
    %v1224 = vadd.f32 %v1222, %v1223
    %v1225 = vmul.f32 %v1110, %v1110
    %v1226 = vmul.f32 %v1115, %v1115
    %v1227 = vmul.f32 %v1120, %v1120
    %v1228 = vmul.f32 %v1125, %v1125
    %v1229 = vmul.f32 %v1130, %v1130
    %v1230 = vmul.f32 %v1135, %v1135
    %v1231 = vmul.f32 %v1140, %v1140
    %v1232 = vmul.f32 %v1145, %v1145
    %v1233 = vmul.f32 %v1150, %v1150
    %v1234 = vmul.f32 %v1155, %v1155
    %v1235 = vmul.f32 %v1160, %v1160
    %v1236 = vmul.f32 %v1165, %v1165
    %v1237 = vmul.f32 %v1170, %v1170
    %v1238 = vmul.f32 %v1175, %v1175
    %v1239 = vmul.f32 %v1180, %v1180
    %v1240 = vmul.f32 %v1185, %v1185
    %v1241 = vsel %vm838, %v1225, 0.0
    %v1242 = vsel %vm838, %v1226, 0.0
    %v1243 = vadd.f32 %v1241, %v1242
    %v1244 = vsel %vm838, %v1227, 0.0
    %v1245 = vadd.f32 %v1243, %v1244
    %v1246 = vsel %vm838, %v1228, 0.0
    %v1247 = vadd.f32 %v1245, %v1246
    %v1248 = vsel %vm838, %v1229, 0.0
    %v1249 = vadd.f32 %v1247, %v1248
    %v1250 = vsel %vm838, %v1230, 0.0
    %v1251 = vadd.f32 %v1249, %v1250
    %v1252 = vsel %vm838, %v1231, 0.0
    %v1253 = vadd.f32 %v1251, %v1252
    %v1254 = vsel %vm838, %v1232, 0.0
    %v1255 = vadd.f32 %v1253, %v1254
    %v1256 = vsel %vm838, %v1233, 0.0
    %v1257 = vadd.f32 %v1255, %v1256
    %v1258 = vsel %vm838, %v1234, 0.0
    %v1259 = vadd.f32 %v1257, %v1258
    %v1260 = vsel %vm838, %v1235, 0.0
    %v1261 = vadd.f32 %v1259, %v1260
    %v1262 = vsel %vm838, %v1236, 0.0
    %v1263 = vadd.f32 %v1261, %v1262
    %v1264 = vsel %vm838, %v1237, 0.0
    %v1265 = vadd.f32 %v1263, %v1264
    %v1266 = vsel %vm838, %v1238, 0.0
    %v1267 = vadd.f32 %v1265, %v1266
    %v1268 = vsel %vm838, %v1239, 0.0
    %v1269 = vadd.f32 %v1267, %v1268
    %v1270 = vsel %vm838, %v1240, 0.0
    %v1271 = vadd.f32 %v1269, %v1270
    %v1272 = vrot.slane %v1271, 4
    %v1273 = vadd.f32 %v1271, %v1272
    %v1274 = vrot.slane %v1273, 2
    %v1275 = vadd.f32 %v1273, %v1274
    %v1276 = vrot.slane %v1275, 1
    %v1277 = vadd.f32 %v1275, %v1276
    %v1278 = vmul.f32 %v1224, 0.0078125
    %v1279 = vmul.f32 %v1277, 0.0078125
    %v1280 = vmul.f32 %v1278, %v1278
    %v1281 = vsub.f32 %v1279, %v1280
    %v1282 = vmax.f32 %v1281, 0.0
    %v1283 = vadd.f32 %v1282, 1e-05
    %v1284 = vrsqrt.pop %v1283
    %v1285 = vmul.f32 %v43, %v1284
    %v1286 = vmul.f32 %v1278, %v1285
    %v1287 = vsub.f32 %v44, %v1286
    %v1288 = vmul.f32 %v1110, %v1285
    %v1289 = vmul.f32 %v1115, %v1285
    %v1290 = vmul.f32 %v1120, %v1285
    %v1291 = vmul.f32 %v1125, %v1285
    %v1292 = vmul.f32 %v1130, %v1285
    %v1293 = vmul.f32 %v1135, %v1285
    %v1294 = vmul.f32 %v1140, %v1285
    %v1295 = vmul.f32 %v1145, %v1285
    %v1296 = vmul.f32 %v1150, %v1285
    %v1297 = vmul.f32 %v1155, %v1285
    %v1298 = vmul.f32 %v1160, %v1285
    %v1299 = vmul.f32 %v1165, %v1285
    %v1300 = vmul.f32 %v1170, %v1285
    %v1301 = vmul.f32 %v1175, %v1285
    %v1302 = vmul.f32 %v1180, %v1285
    %v1303 = vmul.f32 %v1185, %v1285
    %v1304 = vadd.f32 %v1288, %v1287
    %v1305 = vadd.f32 %v1289, %v1287
    %v1306 = vadd.f32 %v1290, %v1287
    %v1307 = vadd.f32 %v1291, %v1287
    %v1308 = vadd.f32 %v1292, %v1287
    %v1309 = vadd.f32 %v1293, %v1287
    %v1310 = vadd.f32 %v1294, %v1287
    %v1311 = vadd.f32 %v1295, %v1287
    %v1312 = vadd.f32 %v1296, %v1287
    %v1313 = vadd.f32 %v1297, %v1287
    %v1314 = vadd.f32 %v1298, %v1287
    %v1315 = vadd.f32 %v1299, %v1287
    %v1316 = vadd.f32 %v1300, %v1287
    %v1317 = vadd.f32 %v1301, %v1287
    %v1318 = vadd.f32 %v1302, %v1287
    %v1319 = vadd.f32 %v1303, %v1287
    %v1320 = vmax.f32 %v1304, 0.0
    %v1321 = vmax.f32 %v1305, 0.0
    %v1322 = vmax.f32 %v1306, 0.0
    %v1323 = vmax.f32 %v1307, 0.0
    %v1324 = vmax.f32 %v1308, 0.0
    %v1325 = vmax.f32 %v1309, 0.0
    %v1326 = vmax.f32 %v1310, 0.0
    %v1327 = vmax.f32 %v1311, 0.0
    %v1328 = vmax.f32 %v1312, 0.0
    %v1329 = vmax.f32 %v1313, 0.0
    %v1330 = vmax.f32 %v1314, 0.0
    %v1331 = vmax.f32 %v1315, 0.0
    %v1332 = vmax.f32 %v1316, 0.0
    %v1333 = vmax.f32 %v1317, 0.0
    %v1334 = vmax.f32 %v1318, 0.0
    %v1335 = vmax.f32 %v1319, 0.0
    %v1336 = vld [vmem:[%s4] sm:$0xff]
    %v1337 = vld [vmem:[%s4 + $0x8] sm:$0xff]
    %v1338 = vld [vmem:[%s4 + $0x10] sm:$0xff]
    %v1339 = vld [vmem:[%s4 + $0x18] sm:$0xff]
    %v1340 = vld [vmem:[%s4 + $0x20] sm:$0xff]
    %v1341 = vld [vmem:[%s4 + $0x28] sm:$0xff]
    %v1342 = vld [vmem:[%s4 + $0x30] sm:$0xff]
    %v1343 = vld [vmem:[%s4 + $0x38] sm:$0xff]
    %1345 = vset.pattern.permute.xlu0 0
    %1346 = vperm.xlu0 %1345, %v45
    %v1347 = vpop.permute.xlu0 %1346
    %v1350 = vsel %vm838, %v1320, 0
    %v1353 = vsel %vm838, %v1321, 0
    %v1356 = vsel %vm838, %v1322, 0
    %v1359 = vsel %vm838, %v1323, 0
    %v1362 = vsel %vm838, %v1324, 0
    %v1365 = vsel %vm838, %v1325, 0
    %v1368 = vsel %vm838, %v1326, 0
    %v1371 = vsel %vm838, %v1327, 0
    %v1374 = vsel %vm838, %v1328, 0
    %v1377 = vsel %vm838, %v1329, 0
    %v1380 = vsel %vm838, %v1330, 0
    %v1383 = vsel %vm838, %v1331, 0
    %v1386 = vsel %vm838, %v1332, 0
    %v1389 = vsel %vm838, %v1333, 0
    %v1392 = vsel %vm838, %v1334, 0
    %v1395 = vsel %vm838, %v1335, 0
    %1397 = vmatprep.subr.mxu0 0.0
    %1398 = vmatpush1.msra.mxu0 %v1336
    %1399 = vmatprep.subr.mxu0 0.0
    %1400 = vmatpush1.msra.mxu0 %v1337
    %1401 = vmatprep.subr.mxu0 0.0
    %1402 = vmatpush1.msra.mxu0 %v1338
    %1403 = vmatprep.subr.mxu0 0.0
    %1404 = vmatpush1.msra.mxu0 %v1339
    %1405 = vmatprep.subr.mxu0 0.0
    %1406 = vmatpush1.msra.mxu0 %v1340
    %1407 = vmatprep.subr.mxu0 0.0
    %1408 = vmatpush1.msra.mxu0 %v1341
    %1409 = vmatprep.subr.mxu0 0.0
    %1410 = vmatpush1.msra.mxu0 %v1342
    %1411 = vmatprep.subr.mxu0 0.0
    %1412 = vmatpush1.msra.mxu0 %v1343
    %1413 = vmatprep.subr.mxu0 0.0
    %1414 = vmatpush1.msra.mxu0 0.0
    %1415 = vmatprep.subr.mxu0 0.0
    %1416 = vmatpush1.msra.mxu0 0.0
    %1417 = vmatprep.subr.mxu0 0.0
    %1418 = vmatpush1.msra.mxu0 0.0
    %1419 = vmatprep.subr.mxu0 0.0
    %1420 = vmatpush1.msra.mxu0 0.0
    %1421 = vmatprep.subr.mxu0 0.0
    %1422 = vmatpush1.msra.mxu0 0.0
    %1423 = vmatprep.subr.mxu0 0.0
    %1424 = vmatpush1.msra.mxu0 0.0
    %1425 = vmatprep.subr.mxu0 0.0
    %1426 = vmatpush1.msra.mxu0 0.0
    %1427 = vmatprep.subr.mxu0 0.0
    %1428 = vmatpush1.msra.mxu0 0.0
    %1429 = vmatprep.subr.mxu0 0.0
    %1430 = vmatpush1.msra.mxu0 0.0
    %1431 = vmatprep.subr.mxu0 0.0
    %1432 = vmatpush1.msra.mxu0 0.0
    %1433 = vmatprep.subr.mxu0 0.0
    %1434 = vmatpush1.msra.mxu0 0.0
    %1435 = vmatprep.subr.mxu0 0.0
    %1436 = vmatpush1.msra.mxu0 0.0
    %1437 = vmatprep.subr.mxu0 0.0
    %1438 = vmatpush1.msra.mxu0 0.0
    %1439 = vmatprep.subr.mxu0 0.0
    %1440 = vmatpush1.msra.mxu0 0.0
    %1441 = vmatprep.subr.mxu0 0.0
    %1442 = vmatpush1.msra.mxu0 0.0
    %1443 = vmatprep.subr.mxu0 0.0
    %1444 = vmatpush1.msra.mxu0 0.0
    %1445 = vmatprep.subr.mxu0 0.0
    %1446 = vmatpush1.msra.mxu0 0.0
    %1447 = vmatprep.subr.mxu0 0.0
    %1448 = vmatpush1.msra.mxu0 0.0
    %1449 = vmatprep.subr.mxu0 0.0
    %1450 = vmatpush1.msra.mxu0 0.0
    %1451 = vmatprep.subr.mxu0 0.0
    %1452 = vmatpush1.msra.mxu0 0.0
    %1453 = vmatprep.subr.mxu0 0.0
    %1454 = vmatpush1.msra.mxu0 0.0
    %1455 = vmatprep.subr.mxu0 0.0
    %1456 = vmatpush1.msra.mxu0 0.0
    %1457 = vmatprep.subr.mxu0 0.0
    %1458 = vmatpush1.msra.mxu0 0.0
    %1459 = vmatprep.subr.mxu0 0.0
    %1460 = vmatpush1.msra.mxu0 0.0
    %1461 = vmatprep.mubr.f32.mxu0 0.0
    %1462 = vmatmul.mubr.f32.gmra.mrb[0].mxu0 %v1350
    %v1463 = vpop.f32.mrb[0].mxu0
    %v1464 = vadd.f32 %v1347, %v1463
    %v1465 = vpop.f32.mrb[0].mxu0
    %1466 = vmatprep.mubr.f32.mxu0 0.0
    %1467 = vmatmul.mubr.f32.gmra.mrb[0].mxu0 %v1353
    %v1468 = vpop.f32.mrb[0].mxu0
    %v1469 = vadd.f32 %v1347, %v1468
    %v1470 = vpop.f32.mrb[0].mxu0
    %1471 = vmatprep.mubr.f32.mxu0 0.0
    %1472 = vmatmul.mubr.f32.gmra.mrb[0].mxu0 %v1356
    %v1473 = vpop.f32.mrb[0].mxu0
    %v1474 = vadd.f32 %v1347, %v1473
    %v1475 = vpop.f32.mrb[0].mxu0
    %1476 = vmatprep.mubr.f32.mxu0 0.0
    %1477 = vmatmul.mubr.f32.gmra.mrb[0].mxu0 %v1359
    %v1478 = vpop.f32.mrb[0].mxu0
    %v1479 = vadd.f32 %v1347, %v1478
    %v1480 = vpop.f32.mrb[0].mxu0
    %1481 = vmatprep.mubr.f32.mxu0 0.0
    %1482 = vmatmul.mubr.f32.gmra.mrb[0].mxu0 %v1362
    %v1483 = vpop.f32.mrb[0].mxu0
    %v1484 = vadd.f32 %v1347, %v1483
    %v1485 = vpop.f32.mrb[0].mxu0
    %1486 = vmatprep.mubr.f32.mxu0 0.0
    %1487 = vmatmul.mubr.f32.gmra.mrb[0].mxu0 %v1365
    %v1488 = vpop.f32.mrb[0].mxu0
    %v1489 = vadd.f32 %v1347, %v1488
    %v1490 = vpop.f32.mrb[0].mxu0
    %1491 = vmatprep.mubr.f32.mxu0 0.0
    %1492 = vmatmul.mubr.f32.gmra.mrb[0].mxu0 %v1368
    %v1493 = vpop.f32.mrb[0].mxu0
    %v1494 = vadd.f32 %v1347, %v1493
    %v1495 = vpop.f32.mrb[0].mxu0
    %1496 = vmatprep.mubr.f32.mxu0 0.0
    %1497 = vmatmul.mubr.f32.gmra.mrb[0].mxu0 %v1371
    %v1498 = vpop.f32.mrb[0].mxu0
    %v1499 = vadd.f32 %v1347, %v1498
    %v1500 = vpop.f32.mrb[0].mxu0
    %1501 = vmatprep.mubr.f32.mxu0 0.0
    %1502 = vmatmul.mubr.f32.gmra.mrb[0].mxu0 %v1374
    %v1503 = vpop.f32.mrb[0].mxu0
    %v1504 = vadd.f32 %v1347, %v1503
    %v1505 = vpop.f32.mrb[0].mxu0
    %1506 = vmatprep.mubr.f32.mxu0 0.0
    %1507 = vmatmul.mubr.f32.gmra.mrb[0].mxu0 %v1377
    %v1508 = vpop.f32.mrb[0].mxu0
    %v1509 = vadd.f32 %v1347, %v1508
    %v1510 = vpop.f32.mrb[0].mxu0
    %1511 = vmatprep.mubr.f32.mxu0 0.0
    %1512 = vmatmul.mubr.f32.gmra.mrb[0].mxu0 %v1380
    %v1513 = vpop.f32.mrb[0].mxu0
    %v1514 = vadd.f32 %v1347, %v1513
    %v1515 = vpop.f32.mrb[0].mxu0
    %1516 = vmatprep.mubr.f32.mxu0 0.0
    %1517 = vmatmul.mubr.f32.gmra.mrb[0].mxu0 %v1383
    %v1518 = vpop.f32.mrb[0].mxu0
    %v1519 = vadd.f32 %v1347, %v1518
    %v1520 = vpop.f32.mrb[0].mxu0
    %1521 = vmatprep.mubr.f32.mxu0 0.0
    %1522 = vmatmul.mubr.f32.gmra.mrb[0].mxu0 %v1386
    %v1523 = vpop.f32.mrb[0].mxu0
    %v1524 = vadd.f32 %v1347, %v1523
    %v1525 = vpop.f32.mrb[0].mxu0
    %1526 = vmatprep.mubr.f32.mxu0 0.0
    %1527 = vmatmul.mubr.f32.gmra.mrb[0].mxu0 %v1389
    %v1528 = vpop.f32.mrb[0].mxu0
    %v1529 = vadd.f32 %v1347, %v1528
    %v1530 = vpop.f32.mrb[0].mxu0
    %1531 = vmatprep.mubr.f32.mxu0 0.0
    %1532 = vmatmul.mubr.f32.gmra.mrb[0].mxu0 %v1392
    %v1533 = vpop.f32.mrb[0].mxu0
    %v1534 = vadd.f32 %v1347, %v1533
    %v1535 = vpop.f32.mrb[0].mxu0
    %1536 = vmatprep.mubr.f32.mxu0 0.0
    %1537 = vmatmul.mubr.f32.gmra.mrb[0].mxu0 %v1395
    %v1538 = vpop.f32.mrb[0].mxu0
    %v1539 = vadd.f32 %v1347, %v1538
    %v1540 = vpop.f32.mrb[0].mxu0
    %1541 = vdwg.mxu0
    %v1542 = vxor.u32 %v1464, 2147483648
    %v1543 = vxor.u32 %v1469, 2147483648
    %v1544 = vxor.u32 %v1474, 2147483648
    %v1545 = vxor.u32 %v1479, 2147483648
    %v1546 = vxor.u32 %v1484, 2147483648
    %v1547 = vxor.u32 %v1489, 2147483648
    %v1548 = vxor.u32 %v1494, 2147483648
    %v1549 = vxor.u32 %v1499, 2147483648
    %v1550 = vxor.u32 %v1504, 2147483648
    %v1551 = vxor.u32 %v1509, 2147483648
    %v1552 = vxor.u32 %v1514, 2147483648
    %v1553 = vxor.u32 %v1519, 2147483648
    %v1554 = vxor.u32 %v1524, 2147483648
    %v1555 = vxor.u32 %v1529, 2147483648
    %v1556 = vxor.u32 %v1534, 2147483648
    %v1557 = vxor.u32 %v1539, 2147483648
    %v1558 = vmul.f32 %v1542, 1.442695
    %v1559 = vpow.pop %v1558
    %v1560 = vmul.f32 %v1543, 1.442695
    %v1561 = vpow.pop %v1560
    %v1562 = vmul.f32 %v1544, 1.442695
    %v1563 = vpow.pop %v1562
    %v1564 = vmul.f32 %v1545, 1.442695
    %v1565 = vpow.pop %v1564
    %v1566 = vmul.f32 %v1546, 1.442695
    %v1567 = vpow.pop %v1566
    %v1568 = vmul.f32 %v1547, 1.442695
    %v1569 = vpow.pop %v1568
    %v1570 = vmul.f32 %v1548, 1.442695
    %v1571 = vpow.pop %v1570
    %v1572 = vmul.f32 %v1549, 1.442695
    %v1573 = vpow.pop %v1572
    %v1574 = vmul.f32 %v1550, 1.442695
    %v1575 = vpow.pop %v1574
    %v1576 = vmul.f32 %v1551, 1.442695
    %v1577 = vpow.pop %v1576
    %v1578 = vmul.f32 %v1552, 1.442695
    %v1579 = vpow.pop %v1578
    %v1580 = vmul.f32 %v1553, 1.442695
    %v1581 = vpow.pop %v1580
    %v1582 = vmul.f32 %v1554, 1.442695
    %v1583 = vpow.pop %v1582
    %v1584 = vmul.f32 %v1555, 1.442695
    %v1585 = vpow.pop %v1584
    %v1586 = vmul.f32 %v1556, 1.442695
    %v1587 = vpow.pop %v1586
    %v1588 = vmul.f32 %v1557, 1.442695
    %v1589 = vpow.pop %v1588
    %v1590 = vadd.f32 %v1559, 1.0
    %v1591 = vadd.f32 %v1561, 1.0
    %v1592 = vadd.f32 %v1563, 1.0
    %v1593 = vadd.f32 %v1565, 1.0
    %v1594 = vadd.f32 %v1567, 1.0
    %v1595 = vadd.f32 %v1569, 1.0
    %v1596 = vadd.f32 %v1571, 1.0
    %v1597 = vadd.f32 %v1573, 1.0
    %v1598 = vadd.f32 %v1575, 1.0
    %v1599 = vadd.f32 %v1577, 1.0
    %v1600 = vadd.f32 %v1579, 1.0
    %v1601 = vadd.f32 %v1581, 1.0
    %v1602 = vadd.f32 %v1583, 1.0
    %v1603 = vadd.f32 %v1585, 1.0
    %v1604 = vadd.f32 %v1587, 1.0
    %v1605 = vadd.f32 %v1589, 1.0
    %v1606 = vrcp.pop %v1590
    %v1607 = vmul.f32 1.0, %v1606
    %v1608 = vrcp.pop %v1591
    %v1609 = vmul.f32 1.0, %v1608
    %v1610 = vrcp.pop %v1592
    %v1611 = vmul.f32 1.0, %v1610
    %v1612 = vrcp.pop %v1593
    %v1613 = vmul.f32 1.0, %v1612
    %v1614 = vrcp.pop %v1594
    %v1615 = vmul.f32 1.0, %v1614
    %v1616 = vrcp.pop %v1595
    %v1617 = vmul.f32 1.0, %v1616
    %v1618 = vrcp.pop %v1596
    %v1619 = vmul.f32 1.0, %v1618
    %v1620 = vrcp.pop %v1597
    %v1621 = vmul.f32 1.0, %v1620
    %v1622 = vrcp.pop %v1598
    %v1623 = vmul.f32 1.0, %v1622
    %v1624 = vrcp.pop %v1599
    %v1625 = vmul.f32 1.0, %v1624
    %v1626 = vrcp.pop %v1600
    %v1627 = vmul.f32 1.0, %v1626
    %v1628 = vrcp.pop %v1601
    %v1629 = vmul.f32 1.0, %v1628
    %v1630 = vrcp.pop %v1602
    %v1631 = vmul.f32 1.0, %v1630
    %v1632 = vrcp.pop %v1603
    %v1633 = vmul.f32 1.0, %v1632
    %v1634 = vrcp.pop %v1604
    %v1635 = vmul.f32 1.0, %v1634
    %v1636 = vrcp.pop %v1605
    %v1637 = vmul.f32 1.0, %v1636
    %1638 = vst [vmem:[#allocation2] sm:$0xff] %v1607
    %1639 = vst [vmem:[#allocation2 + $0x8] sm:$0xff] %v1609
    %1640 = vst [vmem:[#allocation2 + $0x10] sm:$0xff] %v1611
    %1641 = vst [vmem:[#allocation2 + $0x18] sm:$0xff] %v1613
    %1642 = vst [vmem:[#allocation2 + $0x20] sm:$0xff] %v1615
    %1643 = vst [vmem:[#allocation2 + $0x28] sm:$0xff] %v1617
    %1644 = vst [vmem:[#allocation2 + $0x30] sm:$0xff] %v1619
    %1645 = vst [vmem:[#allocation2 + $0x38] sm:$0xff] %v1621
    %1646 = vst [vmem:[#allocation2 + $0x40] sm:$0xff] %v1623
    %1647 = vst [vmem:[#allocation2 + $0x48] sm:$0xff] %v1625
    %1648 = vst [vmem:[#allocation2 + $0x50] sm:$0xff] %v1627
    %1649 = vst [vmem:[#allocation2 + $0x58] sm:$0xff] %v1629
    %1650 = vst [vmem:[#allocation2 + $0x60] sm:$0xff] %v1631
    %1651 = vst [vmem:[#allocation2 + $0x68] sm:$0xff] %v1633
    %1652 = vst [vmem:[#allocation2 + $0x70] sm:$0xff] %v1635
    %1653 = vst [vmem:[#allocation2 + $0x78] sm:$0xff] %v1637
    // Predicated region
    $region26: #{tpu_custom_call.1} parent=1 // pred_check
      _
    $region27: #{tpu_custom_call.1} parent=1 // pred_check_branch
      %1655 = sbr.rel (0) target = $region29
    $region28: #{tpu_custom_call.1} parent=1 // pred_region
      %s1657 = ssub.s32 2048, 2048
      %1658 = vsyncadd [#allocation3], %s1657
      %s1659 = sshll.u32 [#allocation2], 4
      %s1660 = int_to_ptr.vmem [resolvable:$true] %s1659
      %1665 = dma.vmem_to_hbm [thread:$0]  %s1660, 2048, %s6, [#allocation3], 128, 128, 8
    $region29: #{tpu_custom_call.1} parent=1 // pred_fallthru
      _
    // Predicated region
    $region30: #{tpu_custom_call.1} parent=1 // pred_check
      _
    $region31: #{tpu_custom_call.1} parent=1 // pred_check_branch
      %1667 = sbr.rel (0) target = $region33
    $region32: #{tpu_custom_call.1} parent=1 // pred_region
      %1668 = dma.done [#allocation3], 2048
    $region33: #{tpu_custom_call.1} parent=1 // pred_fallthru
      _
    %1669 = vsyncpa [#allocation3], 1

</llo_original>
